<compile_context>
chip_gen: v6e
topology: v6e:2x2x1
jax: 0.10.0
libtpu: 0.0.40
codegen_flags: <defaults>
</compile_context>

<pallas_src>
import math
from dataclasses import dataclass

import jax
import jax.numpy as jnp
from jax import lax
from jax.experimental import pallas as pl
from jax.experimental.pallas import tpu as pltpu


@dataclass
class TransformerConfig:
    tokens_per_block: int
    max_blocks: int
    attention: str
    n_layers: int
    n_heads: int
    emb_dim: int
    emb_dropout: float = 0.0
    residual_dropout: float = 0.0
    attn_dropout: float = 0.0

    @property
    def max_tokens(self) -> int:
        return self.tokens_per_block * self.max_blocks


def build_mask(config: TransformerConfig) -> jnp.ndarray:
    """Replica of the torch mask buffer; used only by the pure-JAX reference."""
    mt = config.max_tokens
    causal = jnp.tril(jnp.ones((mt, mt), dtype=jnp.float32))
    if config.attention == "causal":
        return causal
    blk = jnp.arange(mt) // config.tokens_per_block
    block_diag = (blk[:, None] == blk[None, :]).astype(jnp.float32)
    return jnp.maximum(causal, block_diag)


# ----------------------------------------------------------------------------
# Kernel 1: fused Q/K/V projection -> head-split (b, h, t, d) outputs.
# ----------------------------------------------------------------------------
def _make_qkv_kernel(n_heads, head_dim, compute_dtype):
    def kernel(x_ref, wq_ref, bq_ref, wk_ref, bk_ref, wv_ref, bv_ref,
               q_ref, k_ref, v_ref):
        x = x_ref[0].astype(compute_dtype)                       # (tt, emb)
        tt = x.shape[0]

        def proj(w_ref, b_ref):
            # lane-dense (tt, emb) @ (emb, emb) with f32 accumulation
            y = jnp.dot(x, w_ref[...], preferred_element_type=jnp.float32) + b_ref[...]
            y = y.astype(compute_dtype)
            # single relayout 't(hd)->htd' per tensor (done once per token)
            return y.reshape(tt, n_heads, head_dim).transpose(1, 0, 2)

        q_ref[0] = proj(wq_ref, bq_ref)   # scale already folded into Wq/bq
        k_ref[0] = proj(wk_ref, bk_ref)
        v_ref[0] = proj(wv_ref, bv_ref)

    return kernel


# ----------------------------------------------------------------------------
# Kernel 2: flash attention (online softmax, kv-tile skip) + output projection.
# ----------------------------------------------------------------------------
def _make_flash_kernel(n_heads, head_dim, emb_dim, tq, tk,
                       tokens_per_block, block_causal, compute_dtype):
    def kernel(q_ref, k_ref, v_ref, blk_row_ref, blk_col_ref, wp_ref, bp_ref,
               o_ref, m_sc, l_sc, acc_sc):
        qi = pl.program_id(1)
        ki = pl.program_id(2)

        @pl.when(ki == 0)
        def _init():
            m_sc[...] = jnp.full_like(m_sc, -jnp.inf)
            l_sc[...] = jnp.zeros_like(l_sc)
            acc_sc[...] = jnp.zeros_like(acc_sc)

        # --- kv-tile skip: furthest key column any query row in this q-tile can
        #     attend to.  block_causal may see up to tokens_per_block-1 past the
        #     causal diagonal (conservative bound => never skips a live tile).
        reach = qi * tq + (tq - 1) + (tokens_per_block - 1 if block_causal else 0)
        not_skipped = (ki * tk) <= reach

        @pl.when(not_skipped)
        def _compute():
            q = q_ref[0]                                          # (h, tq, d)
            k = k_ref[0]                                          # (h, tk, d)
            v = v_ref[0]                                          # (h, tk, d)

            # all heads in one batched contraction, f32 accumulation
            s = jnp.einsum("hqd,hkd->hqk", q, k,
                           preferred_element_type=jnp.float32)    # (h, tq, tk)

            # in-kernel mask from iota compares (no (t,t) mask DMA'd from HBM)
            row_g = qi * tq + lax.broadcasted_iota(jnp.int32, (tq, tk), 0)
            col_g = ki * tk + lax.broadcasted_iota(jnp.int32, (tq, tk), 1)
            keep = col_g <= row_g                                 # causal
            if block_causal:
                rb = blk_row_ref[pl.ds(pl.multiple_of(qi * tq, tq), tq), :]  # (tq, 1)
                cb = blk_col_ref[:, pl.ds(pl.multiple_of(ki * tk, tk), tk)]  # (1, tk)
                keep = keep | (rb == cb)
            s = jnp.where(keep[None, :, :], s, jnp.float32(-1e30))  # finite: NaN-proof

            # --- online softmax; normalization deferred to the finalize step.
            m_new = jnp.maximum(m_sc[...], jnp.max(s, axis=-1, keepdims=True))
            alpha = jnp.exp(m_sc[...] - m_new)
            p = jnp.exp(s - m_new)                                # un-normalized
            l_sc[...] = alpha * l_sc[...] + jnp.sum(p, axis=-1, keepdims=True)
            acc_sc[...] = alpha * acc_sc[...] + jnp.einsum(
                "hqk,hkd->hqd", p.astype(compute_dtype), v,
                preferred_element_type=jnp.float32)
            m_sc[...] = m_new

        @pl.when(ki == pl.num_programs(2) - 1)
        def _finalize():
            # exact normalization on the small (h, tq, d) accumulator
            y = acc_sc[...] / l_sc[...]
            # head merge 'htd -> t(hd)' then a single (tq,emb)@(emb,emb) matmul
            y = y.transpose(1, 0, 2).reshape(tq, emb_dim).astype(compute_dtype)
            out = jnp.dot(y, wp_ref[...],
                          preferred_element_type=jnp.float32) + bp_ref[...]
            o_ref[0] = out.astype(o_ref.dtype)                    # lane-dense store

    return kernel


def _pick_tile(t, target):
    """Largest divisor of t that is <= target and a multiple of 8 (or t itself)."""
    for c in range(min(t, target), 0, -1):
        if t % c == 0 and (c % 8 == 0 or c == t):
            return c
    return t


def self_attention_pallas(x, params, config, *, compute_dtype=jnp.bfloat16,
                          q_tile=None, kv_tile=None):
    """x: (bs, t, emb) float32. params: torch-Linear weights stored (in, out), biases (out,)."""
    # TODO(synk): kv_cache incremental-decode path (cache_size > 0) not implemented.
    bs, t, emb_dim = x.shape
    n_heads = config.n_heads
    assert emb_dim % n_heads == 0
    head_dim = emb_dim // n_heads
    block_causal = config.attention == "block_causal"
    scale = 1.0 / math.sqrt(head_dim)

    # Generation-appropriate tiles (256 target for v6e/v7x MXU; any divisor works).
    tq = q_tile if q_tile is not None else _pick_tile(t, 256)
    tk = kv_tile if kv_tile is not None else _pick_tile(t, 256)
    assert t % tq == 0 and t % tk == 0
    tt = tq                      # token tile for the projection kernel

    cdt = compute_dtype
    cbytes = jnp.dtype(cdt).itemsize

    # Host-side one-time weight prep: lane-dense (emb, emb), softmax scale folded into Q.
    wq = (params["wq"] * scale).astype(cdt)
    wk = params["wk"].astype(cdt)
    wv = params["wv"].astype(cdt)
    wp = params["wp"].astype(cdt)
    bq = (params["bq"] * scale).reshape(1, emb_dim).astype(jnp.float32)
    bk = params["bk"].reshape(1, emb_dim).astype(jnp.float32)
    bv = params["bv"].reshape(1, emb_dim).astype(jnp.float32)
    bp = params["bp"].reshape(1, emb_dim).astype(jnp.float32)

    # ---------------- Kernel 1: Q/K/V projection -------------------------------
    # TODO(synk): for emb_dim >= 4096 stream weight slabs from HBM (K-tiled grid
    # axis); here the (emb, emb) weights are VMEM-resident (constant block index,
    # fetched once by the pipeline).
    wfull = lambda: pl.BlockSpec((emb_dim, emb_dim), lambda b, i: (0, 0))
    bfull = lambda: pl.BlockSpec((1, emb_dim), lambda b, i: (0, 0))
    qkv_shape = jax.ShapeDtypeStruct((bs, n_heads, t, head_dim), cdt)
    proj_cost = pl.CostEstimate(
        flops=int(2 * 3 * bs * t * emb_dim * emb_dim),
        transcendentals=0,
        bytes_accessed=int(bs * t * emb_dim * x.dtype.itemsize
                           + 3 * emb_dim * emb_dim * cbytes
                           + 4 * emb_dim * 4
                           + 3 * bs * t * emb_dim * cbytes))

    q, k, v = pl.pallas_call(
        _make_qkv_kernel(n_heads, head_dim, cdt),
        out_shape=(qkv_shape, qkv_shape, qkv_shape),
        grid_spec=pltpu.PrefetchScalarGridSpec(
            num_scalar_prefetch=0,
            grid=(bs, t // tt),
            in_specs=[
                pl.BlockSpec((1, tt, emb_dim), lambda b, i: (b, i, 0)),      # x
                wfull(), bfull(),                                            # Wq, bq
                wfull(), bfull(),                                            # Wk, bk
                wfull(), bfull(),                                            # Wv, bv
            ],
            out_specs=(
                pl.BlockSpec((1, n_heads, tt, head_dim), lambda b, i: (b, 0, i, 0)),
                pl.BlockSpec((1, n_heads, tt, head_dim), lambda b, i: (b, 0, i, 0)),
                pl.BlockSpec((1, n_heads, tt, head_dim), lambda b, i: (b, 0, i, 0)),
            ),
        ),
        compiler_params=pltpu.CompilerParams(
            dimension_semantics=("parallel", "parallel"),
            vmem_limit_bytes=32 * 1024 * 1024),
        cost_estimate=proj_cost,
    )(x, wq, bq, wk, bk, wv, bv)

    # ---------------- Kernel 2: flash attention + output projection ------------
    # Tiny per-token block-id vectors (read only in block_causal mode).
    blk = (jnp.arange(t, dtype=jnp.int32) // config.tokens_per_block)
    blk_row = blk.reshape(t, 1)
    blk_col = blk.reshape(1, t)

    flash_cost = pl.CostEstimate(
        flops=int(4 * bs * n_heads * t * t * head_dim + 2 * bs * t * emb_dim * emb_dim),
        transcendentals=int(bs * n_heads * t * t),
        bytes_accessed=int(3 * bs * t * emb_dim * cbytes
                           + emb_dim * emb_dim * cbytes + emb_dim * 4
                           + bs * t * emb_dim * x.dtype.itemsize))

    out = pl.pallas_call(
        _make_flash_kernel(n_heads, head_dim, emb_dim, tq, tk,
                           config.tokens_per_block, block_causal, cdt),
        out_shape=jax.ShapeDtypeStruct((bs, t, emb_dim), x.dtype),
        grid_spec=pltpu.PrefetchScalarGridSpec(
            num_scalar_prefetch=0,
            grid=(bs, t // tq, t // tk),
            in_specs=[
                pl.BlockSpec((1, n_heads, tq, head_dim), lambda b, qi, ki: (b, 0, qi, 0)),
                pl.BlockSpec((1, n_heads, tk, head_dim), lambda b, qi, ki: (b, 0, ki, 0)),
                pl.BlockSpec((1, n_heads, tk, head_dim), lambda b, qi, ki: (b, 0, ki, 0)),
                pl.BlockSpec((t, 1), lambda b, qi, ki: (0, 0)),              # block ids (rows)
                pl.BlockSpec((1, t), lambda b, qi, ki: (0, 0)),              # block ids (cols)
                pl.BlockSpec((emb_dim, emb_dim), lambda b, qi, ki: (0, 0)),  # Wp
                pl.BlockSpec((1, emb_dim), lambda b, qi, ki: (0, 0)),        # bp
            ],
            out_specs=pl.BlockSpec((1, tq, emb_dim), lambda b, qi, ki: (b, qi, 0)),
            scratch_shapes=[
                pltpu.VMEM((n_heads, tq, 1), jnp.float32),        # m
                pltpu.VMEM((n_heads, tq, 1), jnp.float32),        # l
                pltpu.VMEM((n_heads, tq, head_dim), jnp.float32)  # acc
            ],
        ),
        compiler_params=pltpu.CompilerParams(
            dimension_semantics=("parallel", "parallel", "arbitrary"),
            vmem_limit_bytes=32 * 1024 * 1024),
        cost_estimate=flash_cost,
    )(q, k, v, blk_row, blk_col, wp, bp)

    return out


# ----------------------------------------------------------------------------
# Pure-JAX reference mirroring the PyTorch forward (kv_cache=None, eval mode).
# ----------------------------------------------------------------------------
def self_attention_ref(x, params, mask, n_heads):
    bs, t, emb_dim = x.shape
    hd = emb_dim // n_heads
    q = (x @ params["wq"] + params["bq"]).reshape(bs, t, n_heads, hd).transpose(0, 2, 1, 3)
    k = (x @ params["wk"] + params["bk"]).reshape(bs, t, n_heads, hd).transpose(0, 2, 1, 3)
    v = (x @ params["wv"] + params["bv"]).reshape(bs, t, n_heads, hd).transpose(0, 2, 1, 3)
    attn = jnp.einsum("bhid,bhjd->bhij", q, k) / math.sqrt(hd)
    attn = jnp.where(mask[None, None, :t, :t] == 0, -jnp.inf, attn)
    attn = jax.nn.softmax(attn, axis=-1)
    y = attn @ v
    y = y.transpose(0, 2, 1, 3).reshape(bs, t, emb_dim)
    return y @ params["wp"] + params["bp"]


if __name__ == "__main__":
    bs = 2
    emb_dim = 32
    key = jax.random.PRNGKey(0)
    kx, kq, kk, kvw, kp, kbq, kbk, kbv, kbp = jax.random.split(key, 9)

    init_scale = 1.0 / math.sqrt(emb_dim)
    u = lambda k_, shape: jax.random.uniform(k_, shape, jnp.float32, -init_scale, init_scale)
    params = {
        "wq": u(kq, (emb_dim, emb_dim)), "bq": u(kbq, (emb_dim,)),
        "wk": u(kk, (emb_dim, emb_dim)), "bk": u(kbk, (emb_dim,)),
        "wv": u(kvw, (emb_dim, emb_dim)), "bv": u(kbv, (emb_dim,)),
        "wp": u(kp, (emb_dim, emb_dim)), "bp": u(kbp, (emb_dim,)),
    }

    for attention in ("causal", "block_causal"):
        config = TransformerConfig(
            tokens_per_block=4, max_blocks=4, attention=attention,
            n_layers=1, n_heads=4, emb_dim=emb_dim)
        t = config.max_tokens                        # 16 (full sequence, cache_size = 0)
        x = jax.random.normal(kx, (bs, t, emb_dim), jnp.float32)

        mask = build_mask(config)[:t, :t]
        ref = self_attention_ref(x, params, mask, config.n_heads)

        # f32 MXU path with explicit 8x8 q/kv tiles -> exercises multi-tile grid,
        # online softmax carry, and the causal kv-tile skip.
        out_f32 = jax.block_until_ready(self_attention_pallas(
            x, params, config, compute_dtype=jnp.float32, q_tile=8, kv_tile=8))
        assert out_f32.shape == (bs, t, emb_dim)
        assert jnp.allclose(out_f32, ref, atol=2e-3, rtol=2e-3), f"f32 mismatch ({attention})"

        # Default path: bf16 MXU inputs with f32 accumulation (fast path on v6e/v7x),
        # auto-picked tiles.
        out_bf16 = jax.block_until_ready(self_attention_pallas(x, params, config))
        assert out_bf16.shape == (bs, t, emb_dim)
        assert jnp.allclose(out_bf16, ref, atol=5e-2, rtol=5e-2), f"bf16 mismatch ({attention})"

    print("KERNEL_OK")
</pallas_src>

<mosaic_0001>
module attributes {stable_mosaic.version = 11 : i64} {
  func.func @kernel(%arg0: i32, %arg1: i32, %arg2: memref<1x8x32xf32, #tpu.memory_space<vmem>>, %arg3: memref<32x32xf32, #tpu.memory_space<vmem>>, %arg4: memref<1x32xf32, #tpu.memory_space<vmem>>, %arg5: memref<32x32xf32, #tpu.memory_space<vmem>>, %arg6: memref<1x32xf32, #tpu.memory_space<vmem>>, %arg7: memref<32x32xf32, #tpu.memory_space<vmem>>, %arg8: memref<1x32xf32, #tpu.memory_space<vmem>>, %arg9: memref<1x4x8x8xf32, #tpu.memory_space<vmem>>, %arg10: memref<1x4x8x8xf32, #tpu.memory_space<vmem>>, %arg11: memref<1x4x8x8xf32, #tpu.memory_space<vmem>>) attributes {dimension_semantics = [#tpu.dimension_semantics<parallel>, #tpu.dimension_semantics<parallel>], iteration_bounds = array<i64: 2, 2>, scalar_prefetch = 0 : i64, scratch_operands = 0 : i64, tpu.core_type = #tpu.core_type<tc>, window_params = [{transform_indices = @transform_0, window_bounds = array<i64: 1, 8, 32>}, {pipeline_mode = #tpu.pipeline_mode<synchronous>, transform_indices = @transform_1, window_bounds = array<i64: 32, 32>}, {pipeline_mode = #tpu.pipeline_mode<synchronous>, transform_indices = @transform_2, window_bounds = array<i64: 1, 32>}, {pipeline_mode = #tpu.pipeline_mode<synchronous>, transform_indices = @transform_3, window_bounds = array<i64: 32, 32>}, {pipeline_mode = #tpu.pipeline_mode<synchronous>, transform_indices = @transform_4, window_bounds = array<i64: 1, 32>}, {pipeline_mode = #tpu.pipeline_mode<synchronous>, transform_indices = @transform_5, window_bounds = array<i64: 32, 32>}, {pipeline_mode = #tpu.pipeline_mode<synchronous>, transform_indices = @transform_6, window_bounds = array<i64: 1, 32>}, {transform_indices = @transform_7, window_bounds = array<i64: 1, 4, 8, 8>}, {transform_indices = @transform_8, window_bounds = array<i64: 1, 4, 8, 8>}, {transform_indices = @transform_9, window_bounds = array<i64: 1, 4, 8, 8>}]} {
    %c0 = arith.constant 0 : index
    %c0_0 = arith.constant 0 : index
    %c0_1 = arith.constant 0 : index
    %0 = vector.load %arg2[%c0, %c0_0, %c0_1] : memref<1x8x32xf32, #tpu.memory_space<vmem>>, vector<1x8x32xf32>
    %1 = vector.shape_cast %0 : vector<1x8x32xf32> to vector<8x32xf32>
    %c0_2 = arith.constant 0 : index
    %c0_3 = arith.constant 0 : index
    %2 = vector.load %arg3[%c0_2, %c0_3] : memref<32x32xf32, #tpu.memory_space<vmem>>, vector<32x32xf32>
    %cst = arith.constant dense<0.000000e+00> : vector<8x32xf32>
    %3 = tpu.matmul %1, %2, %cst {dimension_numbers = #tpu.dot_dimension_numbers<[1], [0], [0], [1], [0, 0, 1, 1], [], []>} : vector<8x32xf32>, vector<32x32xf32>, vector<8x32xf32> -> vector<8x32xf32>
    %c0_4 = arith.constant 0 : index
    %c0_5 = arith.constant 0 : index
    %4 = vector.load %arg4[%c0_4, %c0_5] : memref<1x32xf32, #tpu.memory_space<vmem>>, vector<1x32xf32>
    %5 = vector.broadcast %4 : vector<1x32xf32> to vector<8x32xf32>
    %6 = arith.addf %3, %5 : vector<8x32xf32>
    %7 = vector.shape_cast %6 : vector<8x32xf32> to vector<8x4x8xf32>
    %8 = tpu.transpose %7, [1, 0, 2] : vector<8x4x8xf32> -> vector<4x8x8xf32>
    %c0_6 = arith.constant 0 : index
    %c0_7 = arith.constant 0 : index
    %c0_8 = arith.constant 0 : index
    %c0_9 = arith.constant 0 : index
    %9 = vector.load %arg9[%c0_6, %c0_7, %c0_8, %c0_9] : memref<1x4x8x8xf32, #tpu.memory_space<vmem>>, vector<1x4x8x8xf32>
    %10 = vector.shape_cast %9 : vector<1x4x8x8xf32> to vector<4x8x8xf32>
    %11 = vector.shape_cast %8 : vector<4x8x8xf32> to vector<1x4x8x8xf32>
    tpu.vector_store %arg9[%c0_6, %c0_7, %c0_8, %c0_9], %11 {strides = array<i32>} : memref<1x4x8x8xf32, #tpu.memory_space<vmem>>, vector<1x4x8x8xf32>,
    %c0_10 = arith.constant 0 : index
    %c0_11 = arith.constant 0 : index
    %12 = vector.load %arg5[%c0_10, %c0_11] : memref<32x32xf32, #tpu.memory_space<vmem>>, vector<32x32xf32>
    %cst_12 = arith.constant dense<0.000000e+00> : vector<8x32xf32>
    %13 = tpu.matmul %1, %12, %cst_12 {dimension_numbers = #tpu.dot_dimension_numbers<[1], [0], [0], [1], [0, 0, 1, 1], [], []>} : vector<8x32xf32>, vector<32x32xf32>, vector<8x32xf32> -> vector<8x32xf32>
    %c0_13 = arith.constant 0 : index
    %c0_14 = arith.constant 0 : index
    %14 = vector.load %arg6[%c0_13, %c0_14] : memref<1x32xf32, #tpu.memory_space<vmem>>, vector<1x32xf32>
    %15 = vector.broadcast %14 : vector<1x32xf32> to vector<8x32xf32>
    %16 = arith.addf %13, %15 : vector<8x32xf32>
    %17 = vector.shape_cast %16 : vector<8x32xf32> to vector<8x4x8xf32>
    %18 = tpu.transpose %17, [1, 0, 2] : vector<8x4x8xf32> -> vector<4x8x8xf32>
    %c0_15 = arith.constant 0 : index
    %c0_16 = arith.constant 0 : index
    %c0_17 = arith.constant 0 : index
    %c0_18 = arith.constant 0 : index
    %19 = vector.load %arg10[%c0_15, %c0_16, %c0_17, %c0_18] : memref<1x4x8x8xf32, #tpu.memory_space<vmem>>, vector<1x4x8x8xf32>
    %20 = vector.shape_cast %19 : vector<1x4x8x8xf32> to vector<4x8x8xf32>
    %21 = vector.shape_cast %18 : vector<4x8x8xf32> to vector<1x4x8x8xf32>
    tpu.vector_store %arg10[%c0_15, %c0_16, %c0_17, %c0_18], %21 {strides = array<i32>} : memref<1x4x8x8xf32, #tpu.memory_space<vmem>>, vector<1x4x8x8xf32>,
    %c0_19 = arith.constant 0 : index
    %c0_20 = arith.constant 0 : index
    %22 = vector.load %arg7[%c0_19, %c0_20] : memref<32x32xf32, #tpu.memory_space<vmem>>, vector<32x32xf32>
    %cst_21 = arith.constant dense<0.000000e+00> : vector<8x32xf32>
    %23 = tpu.matmul %1, %22, %cst_21 {dimension_numbers = #tpu.dot_dimension_numbers<[1], [0], [0], [1], [0, 0, 1, 1], [], []>} : vector<8x32xf32>, vector<32x32xf32>, vector<8x32xf32> -> vector<8x32xf32>
    %c0_22 = arith.constant 0 : index
    %c0_23 = arith.constant 0 : index
    %24 = vector.load %arg8[%c0_22, %c0_23] : memref<1x32xf32, #tpu.memory_space<vmem>>, vector<1x32xf32>
    %25 = vector.broadcast %24 : vector<1x32xf32> to vector<8x32xf32>
    %26 = arith.addf %23, %25 : vector<8x32xf32>
    %27 = vector.shape_cast %26 : vector<8x32xf32> to vector<8x4x8xf32>
    %28 = tpu.transpose %27, [1, 0, 2] : vector<8x4x8xf32> -> vector<4x8x8xf32>
    %c0_24 = arith.constant 0 : index
    %c0_25 = arith.constant 0 : index
    %c0_26 = arith.constant 0 : index
    %c0_27 = arith.constant 0 : index
    %29 = vector.load %arg11[%c0_24, %c0_25, %c0_26, %c0_27] : memref<1x4x8x8xf32, #tpu.memory_space<vmem>>, vector<1x4x8x8xf32>
    %30 = vector.shape_cast %29 : vector<1x4x8x8xf32> to vector<4x8x8xf32>
    %31 = vector.shape_cast %28 : vector<4x8x8xf32> to vector<1x4x8x8xf32>
    tpu.vector_store %arg11[%c0_24, %c0_25, %c0_26, %c0_27], %31 {strides = array<i32>} : memref<1x4x8x8xf32, #tpu.memory_space<vmem>>, vector<1x4x8x8xf32>,
    return
  }
  func.func @transform_0(%arg0: i32, %arg1: i32) -> (i32, i32, i32) {
    %c0_i32 = arith.constant 0 : i32
    %c0_i32_0 = arith.constant 0 : i32
    return %arg0, %arg1, %c0_i32 : i32, i32, i32
  }
  func.func @transform_1(%arg0: i32, %arg1: i32) -> (i32, i32) {
    %c0_i32 = arith.constant 0 : i32
    %c0_i32_0 = arith.constant 0 : i32
    %c0_i32_1 = arith.constant 0 : i32
    return %c0_i32, %c0_i32_0 : i32, i32
  }
  func.func @transform_2(%arg0: i32, %arg1: i32) -> (i32, i32) {
    %c0_i32 = arith.constant 0 : i32
    %c0_i32_0 = arith.constant 0 : i32
    %c0_i32_1 = arith.constant 0 : i32
    return %c0_i32, %c0_i32_0 : i32, i32
  }
  func.func @transform_3(%arg0: i32, %arg1: i32) -> (i32, i32) {
    %c0_i32 = arith.constant 0 : i32
    %c0_i32_0 = arith.constant 0 : i32
    %c0_i32_1 = arith.constant 0 : i32
    return %c0_i32, %c0_i32_0 : i32, i32
  }
  func.func @transform_4(%arg0: i32, %arg1: i32) -> (i32, i32) {
    %c0_i32 = arith.constant 0 : i32
    %c0_i32_0 = arith.constant 0 : i32
    %c0_i32_1 = arith.constant 0 : i32
    return %c0_i32, %c0_i32_0 : i32, i32
  }
  func.func @transform_5(%arg0: i32, %arg1: i32) -> (i32, i32) {
    %c0_i32 = arith.constant 0 : i32
    %c0_i32_0 = arith.constant 0 : i32
    %c0_i32_1 = arith.constant 0 : i32
    return %c0_i32, %c0_i32_0 : i32, i32
  }
  func.func @transform_6(%arg0: i32, %arg1: i32) -> (i32, i32) {
    %c0_i32 = arith.constant 0 : i32
    %c0_i32_0 = arith.constant 0 : i32
    %c0_i32_1 = arith.constant 0 : i32
    return %c0_i32, %c0_i32_0 : i32, i32
  }
  func.func @transform_7(%arg0: i32, %arg1: i32) -> (i32, i32, i32, i32) {
    %c0_i32 = arith.constant 0 : i32
    %c0_i32_0 = arith.constant 0 : i32
    %c0_i32_1 = arith.constant 0 : i32
    return %arg0, %c0_i32, %arg1, %c0_i32_0 : i32, i32, i32, i32
  }
  func.func @transform_8(%arg0: i32, %arg1: i32) -> (i32, i32, i32, i32) {
    %c0_i32 = arith.constant 0 : i32
    %c0_i32_0 = arith.constant 0 : i32
    %c0_i32_1 = arith.constant 0 : i32
    return %arg0, %c0_i32, %arg1, %c0_i32_0 : i32, i32, i32, i32
  }
  func.func @transform_9(%arg0: i32, %arg1: i32) -> (i32, i32, i32, i32) {
    %c0_i32 = arith.constant 0 : i32
    %c0_i32_0 = arith.constant 0 : i32
    %c0_i32_1 = arith.constant 0 : i32
    return %arg0, %c0_i32, %arg1, %c0_i32_0 : i32, i32, i32, i32
  }
}

</mosaic_0001>

<llo_original>
// kernel: tpu_custom_call.1
$region0: #{tpu_custom_call.1}
  #allocation0 [shape = 'u32[]', space=smem, size = 0x4, offset = 0x4, fixed_abs, tag = 'smem constant byte address 0x4 - core index']
  #allocation1 [shape = 'u32[144,128]{1,0:T(1,128)}', space=vmem, size = 0x12000, scoped, tag = 'internal scratch']
  %s0 = inlined_call_operand.hbm [shape: f32[2,16,32], index: 0, kind: input, shape index: {}]
  %s1 = inlined_call_operand.hbm [shape: f32[32,32], index: 1, kind: input, shape index: {}]
  %s2 = inlined_call_operand.vmem [shape: f32[1,32], index: 2, kind: input, shape index: {}]
  %s3 = inlined_call_operand.hbm [shape: f32[32,32], index: 3, kind: input, shape index: {}]
  %s4 = inlined_call_operand.vmem [shape: f32[1,32], index: 4, kind: input, shape index: {}]
  %s5 = inlined_call_operand.hbm [shape: f32[32,32], index: 5, kind: input, shape index: {}]
  %s6 = inlined_call_operand.vmem [shape: f32[1,32], index: 6, kind: input, shape index: {}]
  %s7 = inlined_call_operand.vmem [shape: f32[2,4,16,8], index: 7, kind: output, shape index: {0}]
  %s8 = inlined_call_operand.vmem [shape: f32[2,4,16,8], index: 8, kind: output, shape index: {1}]
  %s9 = inlined_call_operand.vmem [shape: f32[2,4,16,8], index: 9, kind: output, shape index: {2}]
  %10 = xla_tuple %s7, %s8, %s9
  %s11 = sld [smem:[#allocation0]]
  $region195: #{tpu_custom_call.1} parent=0
    _
  %s13 = ssub.s32 1, %s11
  %s14 = scalar_select 0, %s13, %s11
  $region1: #{tpu_custom_call.1} parent=0
    #allocation2 [shape = 'u8[8192]{0}', space=vmem, size = 0x2000, scoped, tag = 'input window, operand 0']
    #allocation3 [shape = 's32[2]{0}', space=sflag, size = 0x8, scoped, tag = 'scoped memory for tpu_custom_call.1']
    #allocation4 [shape = 'u8[16384]{0}', space=vmem, size = 0x4000, scoped, tag = 'input window, operand 1, single buffered']
    #allocation5 [shape = 's32[1]{0}', space=sflag, size = 0x4, scoped, tag = 'scoped memory for tpu_custom_call.1']
    #allocation6 [shape = 'u8[16384]{0}', space=vmem, size = 0x4000, scoped, tag = 'input window, operand 3, single buffered']
    #allocation7 [shape = 'u8[16384]{0}', space=vmem, size = 0x4000, scoped, tag = 'input window, operand 5, single buffered']
    #allocation8 [shape = 's32[1]{0}', space=sflag, size = 0x4, scoped, tag = 'scoped memory for tpu_custom_call.1']
    #allocation9 [shape = 'u8[32768]{0}', space=vmem, size = 0x8000, scoped, tag = 'output window, operand 0']
    #allocation10 [shape = 'u8[32768]{0}', space=vmem, size = 0x8000, scoped, tag = 'output window, operand 1']
    #allocation11 [shape = 'u8[32768]{0}', space=vmem, size = 0x8000, scoped, tag = 'output window, operand 2']
    %15 = vsyncpa [#allocation3], 0
    %s16 = scalar_lea.sflag [#allocation3], 1
    %17 = vsyncpa %s16, 0
    %18 = vsyncpa [#allocation5], 0
    %19 = vsyncpa [#allocation8], 0
    loop: start=0, step=1, limit=6
    $region2: #{tpu_custom_call.1} parent=1 // loop_pre_header
      _
    $region3: #{tpu_custom_call.1} parent=1 // loop_header
      %s21 = sphi 0, %s25
      %p22 = scmp.ge.s32.totalorder %s21, 6
      %s28 = sphi 0, %s40
      %s29 = sphi 0, %s36
      %s30 = sphi 0, %s28
      %s31 = sphi 0, %s29
      %s32 = sphi 0, %s30
      %s33 = sphi 0, %s31
      %s45 = sphi 0, %s47
      %s48 = sphi 0, %s45
      %s49 = sphi 0, %s48
      %s65 = sphi 0, %s49
      %s69 = sphi 0, %s69
      %s71 = sphi 0, %s69
      %s72 = sphi 0, %s71
      %s86 = sphi 0, %s72
      %s90 = sphi 0, %s90
      %s92 = sphi 0, %s90
      %s93 = sphi 0, %s92
      %s107 = sphi 0, %s93
      %s111 = sphi 0, %s111
      %s113 = sphi 0, %s111
      %s114 = sphi 0, %s113
      %s128 = sphi 0, %s114
      %s132 = sphi 0, %s132
      %s134 = sphi 0, %s132
      %s135 = sphi 0, %s134
      %s149 = sphi 0, %s135
      %s153 = sphi 0, %s153
      %s155 = sphi 0, %s153
      %s156 = sphi 0, %s155
      %s170 = sphi 0, %s156
      %s174 = sphi 0, %s174
      %s176 = sphi 0, %s174
      %s177 = sphi 0, %s176
      %s191 = sphi 0, %s177
      %s199 = sphi 0, %s201
      %s202 = sphi 0, %s199
      %s203 = sphi 0, %s202
      %s219 = sphi 0, %s203
      %s227 = sphi 0, %s229
      %s230 = sphi 0, %s227
      %s231 = sphi 0, %s230
      %s247 = sphi 0, %s231
      %s255 = sphi 0, %s257
      %s258 = sphi 0, %s255
      %s259 = sphi 0, %s258
      %s275 = sphi 0, %s259
    $region4: #{tpu_custom_call.1} parent=1 // loop_header_branch
      %24 = sbr.rel (%p22) target = $region8
    $region5: #{tpu_custom_call.1} parent=1 // loop_body
      %s26 = ssub.s32 %s21, 1
      %s27 = ssub.s32 %s21, 2
      %s34 = sadd.s32 1, %s29
      %p35 = scmp.ge.s32.totalorder %s34, 2
      %s36 = scalar_select %p35, 0, %s34
      %s37 = sadd.s32 1, %s28
      %s38 = scalar_select %p35, %s37, %s28
      %p39 = scmp.ge.s32.totalorder %s38, 2
      %s40 = scalar_select %p39, 0, %s38
      %s41 = ssub.s32 %s28, %s40
      %s42 = ssub.s32 %s29, %s36
      %s43 = sor.u32 %s41, %s42
      %p44 = scmp.eq.s32.totalorder %s43, 0
      %s46 = sadd.s32 %s45, 1
      %s47 = scalar_select %p44, %s45, %s46
      %p50 = pneg %p44
      %p51 = scmp.eq.s32.totalorder %s21, 3
      %p52 = por %p50, %p51
      %p53 = scmp.ne.s32.totalorder %s45, %s48
      %p54 = scmp.eq.s32.totalorder %s21, 0
      %p55 = por %p53, %p54
      %p56 = scmp.ne.s32.totalorder %s45, %s48
      %p57 = scmp.eq.s32.totalorder %s26, 3
      %p58 = por %p56, %p57
      %p59 = scmp.ne.s32.totalorder %s48, %s49
      %p60 = scmp.eq.s32.totalorder %s26, 0
      %p61 = por %p59, %p60
      %p62 = scmp.ne.s32.totalorder %s48, %s49
      %p63 = scmp.eq.s32.totalorder %s27, 3
      %p64 = por %p62, %p63
      %p66 = scmp.ne.s32.totalorder %s49, %s65
      %p67 = scmp.eq.s32.totalorder %s27, 0
      %p68 = por %p66, %p67
      %s70 = sadd.s32 %s69, 1
      %p73 = scmp.eq.s32.totalorder %s21, 3
      %p74 = scmp.ne.s32.totalorder %s69, %s71
      %p75 = scmp.eq.s32.totalorder %s21, 0
      %p76 = por %p74, %p75
      %p77 = scmp.ne.s32.totalorder %s69, %s71
      %p78 = scmp.eq.s32.totalorder %s26, 3
      %p79 = por %p77, %p78
      %p80 = scmp.ne.s32.totalorder %s71, %s72
      %p81 = scmp.eq.s32.totalorder %s26, 0
      %p82 = por %p80, %p81
      %p83 = scmp.ne.s32.totalorder %s71, %s72
      %p84 = scmp.eq.s32.totalorder %s27, 3
      %p85 = por %p83, %p84
      %p87 = scmp.ne.s32.totalorder %s72, %s86
      %p88 = scmp.eq.s32.totalorder %s27, 0
      %p89 = por %p87, %p88
      %s91 = sadd.s32 %s90, 1
      %p94 = scmp.eq.s32.totalorder %s21, 3
      %p95 = scmp.ne.s32.totalorder %s90, %s92
      %p96 = scmp.eq.s32.totalorder %s21, 0
      %p97 = por %p95, %p96
      %p98 = scmp.ne.s32.totalorder %s90, %s92
      %p99 = scmp.eq.s32.totalorder %s26, 3
      %p100 = por %p98, %p99
      %p101 = scmp.ne.s32.totalorder %s92, %s93
      %p102 = scmp.eq.s32.totalorder %s26, 0
      %p103 = por %p101, %p102
      %p104 = scmp.ne.s32.totalorder %s92, %s93
      %p105 = scmp.eq.s32.totalorder %s27, 3
      %p106 = por %p104, %p105
      %p108 = scmp.ne.s32.totalorder %s93, %s107
      %p109 = scmp.eq.s32.totalorder %s27, 0
      %p110 = por %p108, %p109
      %s112 = sadd.s32 %s111, 1
      %p115 = scmp.eq.s32.totalorder %s21, 3
      %p116 = scmp.ne.s32.totalorder %s111, %s113
      %p117 = scmp.eq.s32.totalorder %s21, 0
      %p118 = por %p116, %p117
      %p119 = scmp.ne.s32.totalorder %s111, %s113
      %p120 = scmp.eq.s32.totalorder %s26, 3
      %p121 = por %p119, %p120
      %p122 = scmp.ne.s32.totalorder %s113, %s114
      %p123 = scmp.eq.s32.totalorder %s26, 0
      %p124 = por %p122, %p123
      %p125 = scmp.ne.s32.totalorder %s113, %s114
      %p126 = scmp.eq.s32.totalorder %s27, 3
      %p127 = por %p125, %p126
      %p129 = scmp.ne.s32.totalorder %s114, %s128
      %p130 = scmp.eq.s32.totalorder %s27, 0
      %p131 = por %p129, %p130
      %s133 = sadd.s32 %s132, 1
      %p136 = scmp.eq.s32.totalorder %s21, 3
      %p137 = scmp.ne.s32.totalorder %s132, %s134
      %p138 = scmp.eq.s32.totalorder %s21, 0
      %p139 = por %p137, %p138
      %p140 = scmp.ne.s32.totalorder %s132, %s134
      %p141 = scmp.eq.s32.totalorder %s26, 3
      %p142 = por %p140, %p141
      %p143 = scmp.ne.s32.totalorder %s134, %s135
      %p144 = scmp.eq.s32.totalorder %s26, 0
      %p145 = por %p143, %p144
      %p146 = scmp.ne.s32.totalorder %s134, %s135
      %p147 = scmp.eq.s32.totalorder %s27, 3
      %p148 = por %p146, %p147
      %p150 = scmp.ne.s32.totalorder %s135, %s149
      %p151 = scmp.eq.s32.totalorder %s27, 0
      %p152 = por %p150, %p151
      %s154 = sadd.s32 %s153, 1
      %p157 = scmp.eq.s32.totalorder %s21, 3
      %p158 = scmp.ne.s32.totalorder %s153, %s155
      %p159 = scmp.eq.s32.totalorder %s21, 0
      %p160 = por %p158, %p159
      %p161 = scmp.ne.s32.totalorder %s153, %s155
      %p162 = scmp.eq.s32.totalorder %s26, 3
      %p163 = por %p161, %p162
      %p164 = scmp.ne.s32.totalorder %s155, %s156
      %p165 = scmp.eq.s32.totalorder %s26, 0
      %p166 = por %p164, %p165
      %p167 = scmp.ne.s32.totalorder %s155, %s156
      %p168 = scmp.eq.s32.totalorder %s27, 3
      %p169 = por %p167, %p168
      %p171 = scmp.ne.s32.totalorder %s156, %s170
      %p172 = scmp.eq.s32.totalorder %s27, 0
      %p173 = por %p171, %p172
      %s175 = sadd.s32 %s174, 1
      %p178 = scmp.eq.s32.totalorder %s21, 3
      %p179 = scmp.ne.s32.totalorder %s174, %s176
      %p180 = scmp.eq.s32.totalorder %s21, 0
      %p181 = por %p179, %p180
      %p182 = scmp.ne.s32.totalorder %s174, %s176
      %p183 = scmp.eq.s32.totalorder %s26, 3
      %p184 = por %p182, %p183
      %p185 = scmp.ne.s32.totalorder %s176, %s177
      %p186 = scmp.eq.s32.totalorder %s26, 0
      %p187 = por %p185, %p186
      %p188 = scmp.ne.s32.totalorder %s176, %s177
      %p189 = scmp.eq.s32.totalorder %s27, 3
      %p190 = por %p188, %p189
      %p192 = scmp.ne.s32.totalorder %s177, %s191
      %p193 = scmp.eq.s32.totalorder %s27, 0
      %p194 = por %p192, %p193
      %s195 = ssub.s32 %s28, %s40
      %s196 = ssub.s32 %s29, %s36
      %s197 = sor.u32 %s195, %s196
      %p198 = scmp.eq.s32.totalorder %s197, 0
      %s200 = sadd.s32 %s199, 1
      %s201 = scalar_select %p198, %s199, %s200
      %p204 = pneg %p198
      %p205 = scmp.eq.s32.totalorder %s21, 3
      %p206 = por %p204, %p205
      %p207 = scmp.ne.s32.totalorder %s199, %s202
      %p208 = scmp.eq.s32.totalorder %s21, 0
      %p209 = por %p207, %p208
      %p210 = scmp.ne.s32.totalorder %s199, %s202
      %p211 = scmp.eq.s32.totalorder %s26, 3
      %p212 = por %p210, %p211
      %p213 = scmp.ne.s32.totalorder %s202, %s203
      %p214 = scmp.eq.s32.totalorder %s26, 0
      %p215 = por %p213, %p214
      %p216 = scmp.ne.s32.totalorder %s202, %s203
      %p217 = scmp.eq.s32.totalorder %s27, 3
      %p218 = por %p216, %p217
      %p220 = scmp.ne.s32.totalorder %s203, %s219
      %p221 = scmp.eq.s32.totalorder %s27, 0
      %p222 = por %p220, %p221
      %s223 = ssub.s32 %s28, %s40
      %s224 = ssub.s32 %s29, %s36
      %s225 = sor.u32 %s223, %s224
      %p226 = scmp.eq.s32.totalorder %s225, 0
      %s228 = sadd.s32 %s227, 1
      %s229 = scalar_select %p226, %s227, %s228
      %p232 = pneg %p226
      %p233 = scmp.eq.s32.totalorder %s21, 3
      %p234 = por %p232, %p233
      %p235 = scmp.ne.s32.totalorder %s227, %s230
      %p236 = scmp.eq.s32.totalorder %s21, 0
      %p237 = por %p235, %p236
      %p238 = scmp.ne.s32.totalorder %s227, %s230
      %p239 = scmp.eq.s32.totalorder %s26, 3
      %p240 = por %p238, %p239
      %p241 = scmp.ne.s32.totalorder %s230, %s231
      %p242 = scmp.eq.s32.totalorder %s26, 0
      %p243 = por %p241, %p242
      %p244 = scmp.ne.s32.totalorder %s230, %s231
      %p245 = scmp.eq.s32.totalorder %s27, 3
      %p246 = por %p244, %p245
      %p248 = scmp.ne.s32.totalorder %s231, %s247
      %p249 = scmp.eq.s32.totalorder %s27, 0
      %p250 = por %p248, %p249
      %s251 = ssub.s32 %s28, %s40
      %s252 = ssub.s32 %s29, %s36
      %s253 = sor.u32 %s251, %s252
      %p254 = scmp.eq.s32.totalorder %s253, 0
      %s256 = sadd.s32 %s255, 1
      %s257 = scalar_select %p254, %s255, %s256
      %p260 = pneg %p254
      %p261 = scmp.eq.s32.totalorder %s21, 3
      %p262 = por %p260, %p261
      %p263 = scmp.ne.s32.totalorder %s255, %s258
      %p264 = scmp.eq.s32.totalorder %s21, 0
      %p265 = por %p263, %p264
      %p266 = scmp.ne.s32.totalorder %s255, %s258
      %p267 = scmp.eq.s32.totalorder %s26, 3
      %p268 = por %p266, %p267
      %p269 = scmp.ne.s32.totalorder %s258, %s259
      %p270 = scmp.eq.s32.totalorder %s26, 0
      %p271 = por %p269, %p270
      %p272 = scmp.ne.s32.totalorder %s258, %s259
      %p273 = scmp.eq.s32.totalorder %s27, 3
      %p274 = por %p272, %p273
      %p276 = scmp.ne.s32.totalorder %s259, %s275
      %p277 = scmp.eq.s32.totalorder %s27, 0
      %p278 = por %p276, %p277
      %p279 = scmp.le.s32.totalorder 1, %s21
      %p280 = scmp.lt.s32.totalorder %s21, 5
      %p281 = pnand %p279, %p280
      %p282 = pneg %p281
      // Predicated region
      $region9: #{tpu_custom_call.1} parent=5 // pred_check
        _
      $region10: #{tpu_custom_call.1} parent=5 // pred_check_branch
        %284 = sbr.rel (%p281) target = $region12
      $region11: #{tpu_custom_call.1} parent=5 // pred_region
        %s285 = ssub.s32 %s21, 1
        // Predicated region
        $region13: #{tpu_custom_call.1} parent=11 // pred_check
          %p286 = pneg %p82
        $region14: #{tpu_custom_call.1} parent=11 // pred_check_branch
          %288 = sbr.rel (%p286) target = $region16
        $region15: #{tpu_custom_call.1} parent=11 // pred_region
          %s290 = ssub.s32 512, 512
          %291 = vsyncadd [#allocation5], %s290
          %s292 = sshll.u32 [#allocation4], 4
          %s293 = int_to_ptr.vmem [resolvable:$true] %s292
          %298 = dma.hbm_to_vmem [thread:$0]  %s1, 512, %s293, [#allocation5], 128, 128, 8
        $region16: #{tpu_custom_call.1} parent=11 // pred_fallthru
          _
        // Predicated region
        $region17: #{tpu_custom_call.1} parent=11 // pred_check
          %p299 = pneg %p103
        $region18: #{tpu_custom_call.1} parent=11 // pred_check_branch
          %301 = sbr.rel (%p299) target = $region20
        $region19: #{tpu_custom_call.1} parent=11 // pred_region
          _
        $region20: #{tpu_custom_call.1} parent=11 // pred_fallthru
          _
        // Predicated region
        $region21: #{tpu_custom_call.1} parent=11 // pred_check
          %p302 = pneg %p124
        $region22: #{tpu_custom_call.1} parent=11 // pred_check_branch
          %304 = sbr.rel (%p302) target = $region24
        $region23: #{tpu_custom_call.1} parent=11 // pred_region
          %s306 = ssub.s32 512, 512
          %307 = vsyncadd [#allocation5], %s306
          %s308 = sshll.u32 [#allocation6], 4
          %s309 = int_to_ptr.vmem [resolvable:$true] %s308
          %314 = dma.hbm_to_vmem [thread:$0]  %s3, 512, %s309, [#allocation5], 128, 128, 8
        $region24: #{tpu_custom_call.1} parent=11 // pred_fallthru
          _
        // Predicated region
        $region25: #{tpu_custom_call.1} parent=11 // pred_check
          %p315 = pneg %p145
        $region26: #{tpu_custom_call.1} parent=11 // pred_check_branch
          %317 = sbr.rel (%p315) target = $region28
        $region27: #{tpu_custom_call.1} parent=11 // pred_region
          _
        $region28: #{tpu_custom_call.1} parent=11 // pred_fallthru
          _
        // Predicated region
        $region29: #{tpu_custom_call.1} parent=11 // pred_check
          %p318 = pneg %p166
        $region30: #{tpu_custom_call.1} parent=11 // pred_check_branch
          %320 = sbr.rel (%p318) target = $region32
        $region31: #{tpu_custom_call.1} parent=11 // pred_region
          %s322 = ssub.s32 512, 512
          %323 = vsyncadd [#allocation8], %s322
          %s324 = sshll.u32 [#allocation7], 4
          %s325 = int_to_ptr.vmem [resolvable:$true] %s324
          %330 = dma.hbm_to_vmem [thread:$0]  %s5, 512, %s325, [#allocation8], 128, 128, 8
        $region32: #{tpu_custom_call.1} parent=11 // pred_fallthru
          _
        // Predicated region
        $region33: #{tpu_custom_call.1} parent=11 // pred_check
          %p331 = pneg %p187
        $region34: #{tpu_custom_call.1} parent=11 // pred_check_branch
          %333 = sbr.rel (%p331) target = $region36
        $region35: #{tpu_custom_call.1} parent=11 // pred_region
          _
        $region36: #{tpu_custom_call.1} parent=11 // pred_fallthru
          _
      $region12: #{tpu_custom_call.1} parent=5 // pred_fallthru
        _
      %p334 = scmp.lt.s32.totalorder %s21, 4
      // Predicated region
      $region37: #{tpu_custom_call.1} parent=5 // pred_check
        %p335 = pneg %p334
      $region38: #{tpu_custom_call.1} parent=5 // pred_check_branch
        %337 = sbr.rel (%p335) target = $region40
      $region39: #{tpu_custom_call.1} parent=5 // pred_region
        // Predicated region
        $region41: #{tpu_custom_call.1} parent=39 // pred_check
          %p338 = pneg %p55
        $region42: #{tpu_custom_call.1} parent=39 // pred_check_branch
          %340 = sbr.rel (%p338) target = $region44
        $region43: #{tpu_custom_call.1} parent=39 // pred_region
          %s341 = sand.u32 %s45, 1
          %s342 = scalar_lea.sflag [#allocation3], %s341
          %s343 = sand.u32 %s45, 1
          %s344 = smul.addr %s343, 8
          %s345 = scalar_lea.vmem [#allocation2], %s344
          %s347 = ssub.s32 128, 128
          %348 = vsyncadd %s342, %s347
          %s349 = smul.addr %s28, 2
          %s350 = sadd.s32 %s29, %s349
          %s351 = smul.addr %s350, 128
          %s352 = scalar_lea.hbm %s0, %s351
          %s354 = sshll.u32 %s345, 4
          %s355 = int_to_ptr.vmem [resolvable:$true] %s354
          %357 = dma.hbm_to_vmem [thread:$0]  %s352, 128, %s355, %s342
        $region44: #{tpu_custom_call.1} parent=39 // pred_fallthru
          _
      $region40: #{tpu_custom_call.1} parent=5 // pred_fallthru
        _
      %p358 = scmp.le.s32.totalorder 1, %s21
      %p359 = scmp.lt.s32.totalorder %s21, 5
      %p360 = pnand %p358, %p359
      %p361 = pneg %p360
      // Predicated region
      $region45: #{tpu_custom_call.1} parent=5 // pred_check
        _
      $region46: #{tpu_custom_call.1} parent=5 // pred_check_branch
        %363 = sbr.rel (%p360) target = $region48
      $region47: #{tpu_custom_call.1} parent=5 // pred_region
        %s364 = ssub.s32 %s21, 1
        %s365 = sand.u32 %s48, 1
        %s366 = scalar_lea.sflag [#allocation3], %s365
        %s367 = sand.u32 %s48, 1
        %s368 = smul.addr %s367, 8
        %s369 = scalar_lea.vmem [#allocation2], %s368
        // Predicated region
        $region49: #{tpu_custom_call.1} parent=47 // pred_check
          %p370 = pneg %p61
        $region50: #{tpu_custom_call.1} parent=47 // pred_check_branch
          %372 = sbr.rel (%p370) target = $region52
        $region51: #{tpu_custom_call.1} parent=47 // pred_region
          %373 = dma.done %s366, 128
        $region52: #{tpu_custom_call.1} parent=47 // pred_fallthru
          _
        // Predicated region
        $region53: #{tpu_custom_call.1} parent=47 // pred_check
          %p374 = pneg %p82
        $region54: #{tpu_custom_call.1} parent=47 // pred_check_branch
          %376 = sbr.rel (%p374) target = $region56
        $region55: #{tpu_custom_call.1} parent=47 // pred_region
          %377 = dma.done [#allocation5], 512
        $region56: #{tpu_custom_call.1} parent=47 // pred_fallthru
          _
        // Predicated region
        $region57: #{tpu_custom_call.1} parent=47 // pred_check
          %p378 = pneg %p124
        $region58: #{tpu_custom_call.1} parent=47 // pred_check_branch
          %380 = sbr.rel (%p378) target = $region60
        $region59: #{tpu_custom_call.1} parent=47 // pred_region
          %381 = dma.done [#allocation5], 512
        $region60: #{tpu_custom_call.1} parent=47 // pred_fallthru
          _
        // Predicated region
        $region61: #{tpu_custom_call.1} parent=47 // pred_check
          %p382 = pneg %p166
        $region62: #{tpu_custom_call.1} parent=47 // pred_check_branch
          %384 = sbr.rel (%p382) target = $region64
        $region63: #{tpu_custom_call.1} parent=47 // pred_region
          %385 = dma.done [#allocation8], 512
        $region64: #{tpu_custom_call.1} parent=47 // pred_fallthru
          _
        %s386 = sand.u32 %s48, 1
        %s387 = scalar_lea.sflag [#allocation3], %s386
        %s388 = sand.u32 %s48, 1
        %s389 = smul.addr %s388, 8
        %s390 = scalar_lea.vmem [#allocation2], %s389
        %p391 = pneg %p61
        %p392 = pneg %p58
        %p393 = pneg %p82
        %p394 = pneg %p79
        %p395 = pneg %p103
        %p396 = pneg %p100
        %p397 = pneg %p124
        %p398 = pneg %p121
        %p399 = pneg %p145
        %p400 = pneg %p142
        %p401 = pneg %p166
        %p402 = pneg %p163
        %p403 = pneg %p187
        %p404 = pneg %p184
        %p405 = pneg %p215
        %p406 = pneg %p212
        %s407 = sand.u32 %s202, 1
        %s408 = sand.u32 %s202, 1
        %s409 = smul.addr %s408, 32
        %s410 = scalar_lea.vmem [#allocation9], %s409
        %p411 = pneg %p243
        %p412 = pneg %p240
        %s413 = sand.u32 %s230, 1
        %s414 = sand.u32 %s230, 1
        %s415 = smul.addr %s414, 32
        %s416 = scalar_lea.vmem [#allocation10], %s415
        %p417 = pneg %p271
        %p418 = pneg %p268
        %s419 = sand.u32 %s258, 1
        %s420 = sand.u32 %s258, 1
        %s421 = smul.addr %s420, 32
        %s422 = scalar_lea.vmem [#allocation11], %s421
        %v423 = vld [vmem:[%s369] sm:$0xff]
        %v424 = vld [vmem:[#allocation4] sm:$0xff]
        %v425 = vld [vmem:[#allocation4 + $0x8] sm:$0xff]
        %v426 = vld [vmem:[#allocation4 + $0x10] sm:$0xff]
        %v427 = vld [vmem:[#allocation4 + $0x18] sm:$0xff]
        %v428 = vld [vmem:[%s2] sm:$0x1]
        %v430 = vlaneseq
        %v431 = vshrl.u32 %v430, 7
        %v432 = vsub.s32 0, %v431
        %v433 = vrot.slane %v428, %v432
        %vm435 = vcmask 261120
        %v437 = vsel %vm435, %v423, 0
        %439 = vmatprep.subr.mxu0 0.0
        %440 = vmatpush1.msra.mxu0 0.0
        %441 = vmatprep.subr.mxu0 0.0
        %442 = vmatpush1.msra.mxu0 0.0
        %443 = vmatprep.subr.mxu0 0.0
        %444 = vmatpush1.msra.mxu0 0.0
        %445 = vmatprep.subr.mxu0 0.0
        %446 = vmatpush1.msra.mxu0 0.0
        %447 = vmatprep.subr.mxu0 0.0
        %448 = vmatpush1.msra.mxu0 0.0
        %449 = vmatprep.subr.mxu0 0.0
        %450 = vmatpush1.msra.mxu0 0.0
        %451 = vmatprep.subr.mxu0 0.0
        %452 = vmatpush1.msra.mxu0 0.0
        %453 = vmatprep.subr.mxu0 0.0
        %454 = vmatpush1.msra.mxu0 0.0
        %455 = vmatprep.subr.mxu0 0.0
        %456 = vmatpush1.msra.mxu0 0.0
        %457 = vmatprep.subr.mxu0 0.0
        %458 = vmatpush1.msra.mxu0 0.0
        %459 = vmatprep.subr.mxu0 0.0
        %460 = vmatpush1.msra.mxu0 0.0
        %461 = vmatprep.subr.mxu0 0.0
        %462 = vmatpush1.msra.mxu0 0.0
        %463 = vmatprep.subr.mxu0 0.0
        %464 = vmatpush1.msra.mxu0 %v427
        %465 = vmatprep.subr.mxu0 0.0
        %466 = vmatpush1.msra.mxu0 %v426
        %467 = vmatprep.subr.mxu0 0.0
        %468 = vmatpush1.msra.mxu0 %v425
        %469 = vmatprep.subr.mxu0 0.0
        %470 = vmatpush1.msra.mxu0 %v424
        %471 = vmatprep.subr.mxu0 0.0
        %472 = vmatpush2.msra.mxu0 0.0
        %473 = vmatprep.subr.mxu0 0.0
        %474 = vmatpush2.msra.mxu0 0.0
        %475 = vmatprep.subr.mxu0 0.0
        %476 = vmatpush2.msra.mxu0 0.0
        %477 = vmatprep.subr.mxu0 0.0
        %478 = vmatpush2.msra.mxu0 0.0
        %479 = vmatprep.subr.mxu0 0.0
        %480 = vmatpush2.msra.mxu0 0.0
        %481 = vmatprep.subr.mxu0 0.0
        %482 = vmatpush2.msra.mxu0 0.0
        %483 = vmatprep.subr.mxu0 0.0
        %484 = vmatpush2.msra.mxu0 0.0
        %485 = vmatprep.subr.mxu0 0.0
        %486 = vmatpush2.msra.mxu0 0.0
        %487 = vmatprep.subr.mxu0 0.0
        %488 = vmatpush2.msra.mxu0 0.0
        %489 = vmatprep.subr.mxu0 0.0
        %490 = vmatpush2.msra.mxu0 0.0
        %491 = vmatprep.subr.mxu0 0.0
        %492 = vmatpush2.msra.mxu0 0.0
        %493 = vmatprep.subr.mxu0 0.0
        %494 = vmatpush2.msra.mxu0 0.0
        %495 = vmatprep.subr.mxu0 0.0
        %496 = vmatpush2.msra.mxu0 0.0
        %497 = vmatprep.subr.mxu0 0.0
        %498 = vmatpush2.msra.mxu0 0.0
        %499 = vmatprep.subr.mxu0 0.0
        %500 = vmatpush2.msra.mxu0 0.0
        %501 = vmatprep.subr.mxu0 0.0
        %502 = vmatpush2.msra.mxu0 0.0
        %503 = vmatprep.mubr.f32.mxu0 0.0
        %504 = vmatmul.mubr.f32.gmra.mxu0 %v437
        %v505 = vpop.f32.mrf.mxu0
        %v506 = vadd.f32 %v433, %v505
        %v507 = vpop.f32.mrf.mxu0
        %508 = vdwg.mxu0
        %510 = vrot.lane.b32.xlu0 %v506, 120
        %v511 = vpop.permute.xlu0 %510
        %513 = vrot.lane.b32.xlu0 %v506, 112
        %v514 = vpop.permute.xlu0 %513
        %516 = vrot.lane.b32.xlu0 %v506, 104
        %v517 = vpop.permute.xlu0 %516
        %v519 = vcombine.low %v506, %v514
        %v520 = vcombine.high %v506, %v514
        %v522 = vunpack.c.l.s4 1983009808
        %v523 = vunpack.c.0.s8 %v522
        %v524 = vlaneseq
        %v525 = vshrl.u32 %v524, 7
        %v526 = vsub.s32 %v523, %v525
        %v527 = vrot.slane %v519, %v526
        %v529 = vunpack.c.l.s4 1983009808
        %v530 = vunpack.c.0.s8 %v529
        %v531 = vlaneseq
        %v532 = vshrl.u32 %v531, 7
        %v533 = vsub.s32 %v530, %v532
        %v534 = vrot.slane %v520, %v533
        %v535 = vcombine.low %v511, %v517
        %v536 = vcombine.high %v511, %v517
        %v538 = vunpack.c.l.s4 1983009808
        %v539 = vunpack.c.0.s8 %v538
        %v540 = vlaneseq
        %v541 = vshrl.u32 %v540, 7
        %v542 = vsub.s32 %v539, %v541
        %v543 = vrot.slane %v535, %v542
        %v545 = vunpack.c.l.s4 1983009808
        %v546 = vunpack.c.0.s8 %v545
        %v547 = vlaneseq
        %v548 = vshrl.u32 %v547, 7
        %v549 = vsub.s32 %v546, %v548
        %v550 = vrot.slane %v536, %v549
        %v551 = vcombine.low %v527, %v543
        %v552 = vcombine.high %v527, %v543
        %v554 = vunpack.c.l.s4 1934713408
        %v555 = vunpack.c.0.s8 %v554
        %v556 = vlaneseq
        %v557 = vshrl.u32 %v556, 7
        %v558 = vsub.s32 %v555, %v557
        %v559 = vrot.slane %v551, %v558
        %v561 = vunpack.c.l.s4 1934713408
        %v562 = vunpack.c.0.s8 %v561
        %v563 = vlaneseq
        %v564 = vshrl.u32 %v563, 7
        %v565 = vsub.s32 %v562, %v564
        %v566 = vrot.slane %v552, %v565
        %v567 = vcombine.low %v534, %v550
        %v568 = vcombine.high %v534, %v550
        %v570 = vunpack.c.l.s4 1934713408
        %v571 = vunpack.c.0.s8 %v570
        %v572 = vlaneseq
        %v573 = vshrl.u32 %v572, 7
        %v574 = vsub.s32 %v571, %v573
        %v575 = vrot.slane %v567, %v574
        %v577 = vunpack.c.l.s4 1934713408
        %v578 = vunpack.c.0.s8 %v577
        %v579 = vlaneseq
        %v580 = vshrl.u32 %v579, 7
        %v581 = vsub.s32 %v578, %v580
        %v582 = vrot.slane %v568, %v581
        %v583 = vcombine.high %v559, 0.0
        %v584 = vcombine.high %v566, 0.0
        %v585 = vcombine.high %v575, 0.0
        %v586 = vcombine.high %v582, 0.0
        %v587 = vcombine.low %v559, %v566
        %v589 = vunpack.c.l.s4 1983009808
        %v590 = vunpack.c.0.s8 %v589
        %v591 = vlaneseq
        %v592 = vshrl.u32 %v591, 7
        %v593 = vsub.s32 %v590, %v592
        %v594 = vrot.slane %v587, %v593
        %v595 = vcombine.low %v583, %v584
        %v597 = vunpack.c.l.s4 1983009808
        %v598 = vunpack.c.0.s8 %v597
        %v599 = vlaneseq
        %v600 = vshrl.u32 %v599, 7
        %v601 = vsub.s32 %v598, %v600
        %v602 = vrot.slane %v595, %v601
        %v603 = vcombine.low %v575, %v582
        %v605 = vunpack.c.l.s4 1983009808
        %v606 = vunpack.c.0.s8 %v605
        %v607 = vlaneseq
        %v608 = vshrl.u32 %v607, 7
        %v609 = vsub.s32 %v606, %v608
        %v610 = vrot.slane %v603, %v609
        %v611 = vcombine.low %v585, %v586
        %v613 = vunpack.c.l.s4 1983009808
        %v614 = vunpack.c.0.s8 %v613
        %v615 = vlaneseq
        %v616 = vshrl.u32 %v615, 7
        %v617 = vsub.s32 %v614, %v616
        %v618 = vrot.slane %v611, %v617
        %v619 = vcombine.low %v594, %v602
        %v620 = vcombine.high %v594, %v602
        %v622 = vunpack.c.l.s4 1934713408
        %v623 = vunpack.c.0.s8 %v622
        %v624 = vlaneseq
        %v625 = vshrl.u32 %v624, 7
        %v626 = vsub.s32 %v623, %v625
        %v627 = vrot.slane %v619, %v626
        %v629 = vunpack.c.l.s4 1934713408
        %v630 = vunpack.c.0.s8 %v629
        %v631 = vlaneseq
        %v632 = vshrl.u32 %v631, 7
        %v633 = vsub.s32 %v630, %v632
        %v634 = vrot.slane %v620, %v633
        %v635 = vcombine.low %v610, %v618
        %v636 = vcombine.high %v610, %v618
        %v638 = vunpack.c.l.s4 1934713408
        %v639 = vunpack.c.0.s8 %v638
        %v640 = vlaneseq
        %v641 = vshrl.u32 %v640, 7
        %v642 = vsub.s32 %v639, %v641
        %v643 = vrot.slane %v635, %v642
        %v645 = vunpack.c.l.s4 1934713408
        %v646 = vunpack.c.0.s8 %v645
        %v647 = vlaneseq
        %v648 = vshrl.u32 %v647, 7
        %v649 = vsub.s32 %v646, %v648
        %v650 = vrot.slane %v636, %v649
        %v651 = vcombine.low %v627, %v643
        %v652 = vcombine.high %v627, %v643
        %v653 = vcombine.low %v634, %v650
        %v654 = vcombine.high %v634, %v650
        %vm655 = vcmask 64512
        %656 = vst.msk [vmem:[%s410] sm:$0xff] %vm655, %v651
        %657 = vst.msk [vmem:[%s410 + $0x8] sm:$0xff] %vm655, %v652
        %658 = vst.msk [vmem:[%s410 + $0x10] sm:$0xff] %vm655, %v653
        %659 = vst.msk [vmem:[%s410 + $0x18] sm:$0xff] %vm655, %v654
        %v660 = vld [vmem:[#allocation6] sm:$0xff]
        %v661 = vld [vmem:[#allocation6 + $0x8] sm:$0xff]
        %v662 = vld [vmem:[#allocation6 + $0x10] sm:$0xff]
        %v663 = vld [vmem:[#allocation6 + $0x18] sm:$0xff]
        %v664 = vld [vmem:[%s4] sm:$0x1]
        %v666 = vlaneseq
        %v667 = vshrl.u32 %v666, 7
        %v668 = vsub.s32 0, %v667
        %v669 = vrot.slane %v664, %v668
        %671 = vmatprep.subr.mxu0 0.0
        %672 = vmatpush1.msra.mxu0 0.0
        %673 = vmatprep.subr.mxu0 0.0
        %674 = vmatpush1.msra.mxu0 0.0
        %675 = vmatprep.subr.mxu0 0.0
        %676 = vmatpush1.msra.mxu0 0.0
        %677 = vmatprep.subr.mxu0 0.0
        %678 = vmatpush1.msra.mxu0 0.0
        %679 = vmatprep.subr.mxu0 0.0
        %680 = vmatpush1.msra.mxu0 0.0
        %681 = vmatprep.subr.mxu0 0.0
        %682 = vmatpush1.msra.mxu0 0.0
        %683 = vmatprep.subr.mxu0 0.0
        %684 = vmatpush1.msra.mxu0 0.0
        %685 = vmatprep.subr.mxu0 0.0
        %686 = vmatpush1.msra.mxu0 0.0
        %687 = vmatprep.subr.mxu0 0.0
        %688 = vmatpush1.msra.mxu0 0.0
        %689 = vmatprep.subr.mxu0 0.0
        %690 = vmatpush1.msra.mxu0 0.0
        %691 = vmatprep.subr.mxu0 0.0
        %692 = vmatpush1.msra.mxu0 0.0
        %693 = vmatprep.subr.mxu0 0.0
        %694 = vmatpush1.msra.mxu0 0.0
        %695 = vmatprep.subr.mxu0 0.0
        %696 = vmatpush1.msra.mxu0 %v663
        %697 = vmatprep.subr.mxu0 0.0
        %698 = vmatpush1.msra.mxu0 %v662
        %699 = vmatprep.subr.mxu0 0.0
        %700 = vmatpush1.msra.mxu0 %v661
        %701 = vmatprep.subr.mxu0 0.0
        %702 = vmatpush1.msra.mxu0 %v660
        %703 = vmatprep.subr.mxu0 0.0
        %704 = vmatpush2.msra.mxu0 0.0
        %705 = vmatprep.subr.mxu0 0.0
        %706 = vmatpush2.msra.mxu0 0.0
        %707 = vmatprep.subr.mxu0 0.0
        %708 = vmatpush2.msra.mxu0 0.0
        %709 = vmatprep.subr.mxu0 0.0
        %710 = vmatpush2.msra.mxu0 0.0
        %711 = vmatprep.subr.mxu0 0.0
        %712 = vmatpush2.msra.mxu0 0.0
        %713 = vmatprep.subr.mxu0 0.0
        %714 = vmatpush2.msra.mxu0 0.0
        %715 = vmatprep.subr.mxu0 0.0
        %716 = vmatpush2.msra.mxu0 0.0
        %717 = vmatprep.subr.mxu0 0.0
        %718 = vmatpush2.msra.mxu0 0.0
        %719 = vmatprep.subr.mxu0 0.0
        %720 = vmatpush2.msra.mxu0 0.0
        %721 = vmatprep.subr.mxu0 0.0
        %722 = vmatpush2.msra.mxu0 0.0
        %723 = vmatprep.subr.mxu0 0.0
        %724 = vmatpush2.msra.mxu0 0.0
        %725 = vmatprep.subr.mxu0 0.0
        %726 = vmatpush2.msra.mxu0 0.0
        %727 = vmatprep.subr.mxu0 0.0
        %728 = vmatpush2.msra.mxu0 0.0
        %729 = vmatprep.subr.mxu0 0.0
        %730 = vmatpush2.msra.mxu0 0.0
        %731 = vmatprep.subr.mxu0 0.0
        %732 = vmatpush2.msra.mxu0 0.0
        %733 = vmatprep.subr.mxu0 0.0
        %734 = vmatpush2.msra.mxu0 0.0
        %735 = vmatprep.mubr.f32.mxu0 0.0
        %736 = vmatmul.mubr.f32.gmra.mxu0 %v437
        %v737 = vpop.f32.mrf.mxu0
        %v738 = vadd.f32 %v669, %v737
        %v739 = vpop.f32.mrf.mxu0
        %740 = vdwg.mxu0
        %742 = vrot.lane.b32.xlu0 %v738, 120
        %v743 = vpop.permute.xlu0 %742
        %745 = vrot.lane.b32.xlu0 %v738, 112
        %v746 = vpop.permute.xlu0 %745
        %748 = vrot.lane.b32.xlu0 %v738, 104
        %v749 = vpop.permute.xlu0 %748
        %v751 = vcombine.low %v738, %v746
        %v752 = vcombine.high %v738, %v746
        %v754 = vunpack.c.l.s4 1983009808
        %v755 = vunpack.c.0.s8 %v754
        %v756 = vlaneseq
        %v757 = vshrl.u32 %v756, 7
        %v758 = vsub.s32 %v755, %v757
        %v759 = vrot.slane %v751, %v758
        %v761 = vunpack.c.l.s4 1983009808
        %v762 = vunpack.c.0.s8 %v761
        %v763 = vlaneseq
        %v764 = vshrl.u32 %v763, 7
        %v765 = vsub.s32 %v762, %v764
        %v766 = vrot.slane %v752, %v765
        %v767 = vcombine.low %v743, %v749
        %v768 = vcombine.high %v743, %v749
        %v770 = vunpack.c.l.s4 1983009808
        %v771 = vunpack.c.0.s8 %v770
        %v772 = vlaneseq
        %v773 = vshrl.u32 %v772, 7
        %v774 = vsub.s32 %v771, %v773
        %v775 = vrot.slane %v767, %v774
        %v777 = vunpack.c.l.s4 1983009808
        %v778 = vunpack.c.0.s8 %v777
        %v779 = vlaneseq
        %v780 = vshrl.u32 %v779, 7
        %v781 = vsub.s32 %v778, %v780
        %v782 = vrot.slane %v768, %v781
        %v783 = vcombine.low %v759, %v775
        %v784 = vcombine.high %v759, %v775
        %v786 = vunpack.c.l.s4 1934713408
        %v787 = vunpack.c.0.s8 %v786
        %v788 = vlaneseq
        %v789 = vshrl.u32 %v788, 7
        %v790 = vsub.s32 %v787, %v789
        %v791 = vrot.slane %v783, %v790
        %v793 = vunpack.c.l.s4 1934713408
        %v794 = vunpack.c.0.s8 %v793
        %v795 = vlaneseq
        %v796 = vshrl.u32 %v795, 7
        %v797 = vsub.s32 %v794, %v796
        %v798 = vrot.slane %v784, %v797
        %v799 = vcombine.low %v766, %v782
        %v800 = vcombine.high %v766, %v782
        %v802 = vunpack.c.l.s4 1934713408
        %v803 = vunpack.c.0.s8 %v802
        %v804 = vlaneseq
        %v805 = vshrl.u32 %v804, 7
        %v806 = vsub.s32 %v803, %v805
        %v807 = vrot.slane %v799, %v806
        %v809 = vunpack.c.l.s4 1934713408
        %v810 = vunpack.c.0.s8 %v809
        %v811 = vlaneseq
        %v812 = vshrl.u32 %v811, 7
        %v813 = vsub.s32 %v810, %v812
        %v814 = vrot.slane %v800, %v813
        %v815 = vcombine.high %v791, 0.0
        %v816 = vcombine.high %v798, 0.0
        %v817 = vcombine.high %v807, 0.0
        %v818 = vcombine.high %v814, 0.0
        %v819 = vcombine.low %v791, %v798
        %v821 = vunpack.c.l.s4 1983009808
        %v822 = vunpack.c.0.s8 %v821
        %v823 = vlaneseq
        %v824 = vshrl.u32 %v823, 7
        %v825 = vsub.s32 %v822, %v824
        %v826 = vrot.slane %v819, %v825
        %v827 = vcombine.low %v815, %v816
        %v829 = vunpack.c.l.s4 1983009808
        %v830 = vunpack.c.0.s8 %v829
        %v831 = vlaneseq
        %v832 = vshrl.u32 %v831, 7
        %v833 = vsub.s32 %v830, %v832
        %v834 = vrot.slane %v827, %v833
        %v835 = vcombine.low %v807, %v814
        %v837 = vunpack.c.l.s4 1983009808
        %v838 = vunpack.c.0.s8 %v837
        %v839 = vlaneseq
        %v840 = vshrl.u32 %v839, 7
        %v841 = vsub.s32 %v838, %v840
        %v842 = vrot.slane %v835, %v841
        %v843 = vcombine.low %v817, %v818
        %v845 = vunpack.c.l.s4 1983009808
        %v846 = vunpack.c.0.s8 %v845
        %v847 = vlaneseq
        %v848 = vshrl.u32 %v847, 7
        %v849 = vsub.s32 %v846, %v848
        %v850 = vrot.slane %v843, %v849
        %v851 = vcombine.low %v826, %v834
        %v852 = vcombine.high %v826, %v834
        %v854 = vunpack.c.l.s4 1934713408
        %v855 = vunpack.c.0.s8 %v854
        %v856 = vlaneseq
        %v857 = vshrl.u32 %v856, 7
        %v858 = vsub.s32 %v855, %v857
        %v859 = vrot.slane %v851, %v858
        %v861 = vunpack.c.l.s4 1934713408
        %v862 = vunpack.c.0.s8 %v861
        %v863 = vlaneseq
        %v864 = vshrl.u32 %v863, 7
        %v865 = vsub.s32 %v862, %v864
        %v866 = vrot.slane %v852, %v865
        %v867 = vcombine.low %v842, %v850
        %v868 = vcombine.high %v842, %v850
        %v870 = vunpack.c.l.s4 1934713408
        %v871 = vunpack.c.0.s8 %v870
        %v872 = vlaneseq
        %v873 = vshrl.u32 %v872, 7
        %v874 = vsub.s32 %v871, %v873
        %v875 = vrot.slane %v867, %v874
        %v877 = vunpack.c.l.s4 1934713408
        %v878 = vunpack.c.0.s8 %v877
        %v879 = vlaneseq
        %v880 = vshrl.u32 %v879, 7
        %v881 = vsub.s32 %v878, %v880
        %v882 = vrot.slane %v868, %v881
        %v883 = vcombine.low %v859, %v875
        %v884 = vcombine.high %v859, %v875
        %v885 = vcombine.low %v866, %v882
        %v886 = vcombine.high %v866, %v882
        %887 = vst.msk [vmem:[%s416] sm:$0xff] %vm655, %v883
        %888 = vst.msk [vmem:[%s416 + $0x8] sm:$0xff] %vm655, %v884
        %889 = vst.msk [vmem:[%s416 + $0x10] sm:$0xff] %vm655, %v885
        %890 = vst.msk [vmem:[%s416 + $0x18] sm:$0xff] %vm655, %v886
        %v891 = vld [vmem:[#allocation7] sm:$0xff]
        %v892 = vld [vmem:[#allocation7 + $0x8] sm:$0xff]
        %v893 = vld [vmem:[#allocation7 + $0x10] sm:$0xff]
        %v894 = vld [vmem:[#allocation7 + $0x18] sm:$0xff]
        %v895 = vld [vmem:[%s6] sm:$0x1]
        %v897 = vlaneseq
        %v898 = vshrl.u32 %v897, 7
        %v899 = vsub.s32 0, %v898
        %v900 = vrot.slane %v895, %v899
        %902 = vmatprep.subr.mxu0 0.0
        %903 = vmatpush1.msra.mxu0 0.0
        %904 = vmatprep.subr.mxu0 0.0
        %905 = vmatpush1.msra.mxu0 0.0
        %906 = vmatprep.subr.mxu0 0.0
        %907 = vmatpush1.msra.mxu0 0.0
        %908 = vmatprep.subr.mxu0 0.0
        %909 = vmatpush1.msra.mxu0 0.0
        %910 = vmatprep.subr.mxu0 0.0
        %911 = vmatpush1.msra.mxu0 0.0
        %912 = vmatprep.subr.mxu0 0.0
        %913 = vmatpush1.msra.mxu0 0.0
        %914 = vmatprep.subr.mxu0 0.0
        %915 = vmatpush1.msra.mxu0 0.0
        %916 = vmatprep.subr.mxu0 0.0
        %917 = vmatpush1.msra.mxu0 0.0
        %918 = vmatprep.subr.mxu0 0.0
        %919 = vmatpush1.msra.mxu0 0.0
        %920 = vmatprep.subr.mxu0 0.0
        %921 = vmatpush1.msra.mxu0 0.0
        %922 = vmatprep.subr.mxu0 0.0
        %923 = vmatpush1.msra.mxu0 0.0
        %924 = vmatprep.subr.mxu0 0.0
        %925 = vmatpush1.msra.mxu0 0.0
        %926 = vmatprep.subr.mxu0 0.0
        %927 = vmatpush1.msra.mxu0 %v894
        %928 = vmatprep.subr.mxu0 0.0
        %929 = vmatpush1.msra.mxu0 %v893
        %930 = vmatprep.subr.mxu0 0.0
        %931 = vmatpush1.msra.mxu0 %v892
        %932 = vmatprep.subr.mxu0 0.0
        %933 = vmatpush1.msra.mxu0 %v891
        %934 = vmatprep.subr.mxu0 0.0
        %935 = vmatpush2.msra.mxu0 0.0
        %936 = vmatprep.subr.mxu0 0.0
        %937 = vmatpush2.msra.mxu0 0.0
        %938 = vmatprep.subr.mxu0 0.0
        %939 = vmatpush2.msra.mxu0 0.0
        %940 = vmatprep.subr.mxu0 0.0
        %941 = vmatpush2.msra.mxu0 0.0
        %942 = vmatprep.subr.mxu0 0.0
        %943 = vmatpush2.msra.mxu0 0.0
        %944 = vmatprep.subr.mxu0 0.0
        %945 = vmatpush2.msra.mxu0 0.0
        %946 = vmatprep.subr.mxu0 0.0
        %947 = vmatpush2.msra.mxu0 0.0
        %948 = vmatprep.subr.mxu0 0.0
        %949 = vmatpush2.msra.mxu0 0.0
        %950 = vmatprep.subr.mxu0 0.0
        %951 = vmatpush2.msra.mxu0 0.0
        %952 = vmatprep.subr.mxu0 0.0
        %953 = vmatpush2.msra.mxu0 0.0
        %954 = vmatprep.subr.mxu0 0.0
        %955 = vmatpush2.msra.mxu0 0.0
        %956 = vmatprep.subr.mxu0 0.0
        %957 = vmatpush2.msra.mxu0 0.0
        %958 = vmatprep.subr.mxu0 0.0
        %959 = vmatpush2.msra.mxu0 0.0
        %960 = vmatprep.subr.mxu0 0.0
        %961 = vmatpush2.msra.mxu0 0.0
        %962 = vmatprep.subr.mxu0 0.0
        %963 = vmatpush2.msra.mxu0 0.0
        %964 = vmatprep.subr.mxu0 0.0
        %965 = vmatpush2.msra.mxu0 0.0
        %966 = vmatprep.mubr.f32.mxu0 0.0
        %967 = vmatmul.mubr.f32.gmra.mxu0 %v437
        %v968 = vpop.f32.mrf.mxu0
        %v969 = vadd.f32 %v900, %v968
        %v970 = vpop.f32.mrf.mxu0
        %971 = vdwg.mxu0
        %973 = vrot.lane.b32.xlu0 %v969, 120
        %v974 = vpop.permute.xlu0 %973
        %976 = vrot.lane.b32.xlu0 %v969, 112
        %v977 = vpop.permute.xlu0 %976
        %979 = vrot.lane.b32.xlu0 %v969, 104
        %v980 = vpop.permute.xlu0 %979
        %v982 = vcombine.low %v969, %v977
        %v983 = vcombine.high %v969, %v977
        %v985 = vunpack.c.l.s4 1983009808
        %v986 = vunpack.c.0.s8 %v985
        %v987 = vlaneseq
        %v988 = vshrl.u32 %v987, 7
        %v989 = vsub.s32 %v986, %v988
        %v990 = vrot.slane %v982, %v989
        %v992 = vunpack.c.l.s4 1983009808
        %v993 = vunpack.c.0.s8 %v992
        %v994 = vlaneseq
        %v995 = vshrl.u32 %v994, 7
        %v996 = vsub.s32 %v993, %v995
        %v997 = vrot.slane %v983, %v996
        %v998 = vcombine.low %v974, %v980
        %v999 = vcombine.high %v974, %v980
        %v1001 = vunpack.c.l.s4 1983009808
        %v1002 = vunpack.c.0.s8 %v1001
        %v1003 = vlaneseq
        %v1004 = vshrl.u32 %v1003, 7
        %v1005 = vsub.s32 %v1002, %v1004
        %v1006 = vrot.slane %v998, %v1005
        %v1008 = vunpack.c.l.s4 1983009808
        %v1009 = vunpack.c.0.s8 %v1008
        %v1010 = vlaneseq
        %v1011 = vshrl.u32 %v1010, 7
        %v1012 = vsub.s32 %v1009, %v1011
        %v1013 = vrot.slane %v999, %v1012
        %v1014 = vcombine.low %v990, %v1006
        %v1015 = vcombine.high %v990, %v1006
        %v1017 = vunpack.c.l.s4 1934713408
        %v1018 = vunpack.c.0.s8 %v1017
        %v1019 = vlaneseq
        %v1020 = vshrl.u32 %v1019, 7
        %v1021 = vsub.s32 %v1018, %v1020
        %v1022 = vrot.slane %v1014, %v1021
        %v1024 = vunpack.c.l.s4 1934713408
        %v1025 = vunpack.c.0.s8 %v1024
        %v1026 = vlaneseq
        %v1027 = vshrl.u32 %v1026, 7
        %v1028 = vsub.s32 %v1025, %v1027
        %v1029 = vrot.slane %v1015, %v1028
        %v1030 = vcombine.low %v997, %v1013
        %v1031 = vcombine.high %v997, %v1013
        %v1033 = vunpack.c.l.s4 1934713408
        %v1034 = vunpack.c.0.s8 %v1033
        %v1035 = vlaneseq
        %v1036 = vshrl.u32 %v1035, 7
        %v1037 = vsub.s32 %v1034, %v1036
        %v1038 = vrot.slane %v1030, %v1037
        %v1040 = vunpack.c.l.s4 1934713408
        %v1041 = vunpack.c.0.s8 %v1040
        %v1042 = vlaneseq
        %v1043 = vshrl.u32 %v1042, 7
        %v1044 = vsub.s32 %v1041, %v1043
        %v1045 = vrot.slane %v1031, %v1044
        %v1046 = vcombine.high %v1022, 0.0
        %v1047 = vcombine.high %v1029, 0.0
        %v1048 = vcombine.high %v1038, 0.0
        %v1049 = vcombine.high %v1045, 0.0
        %v1050 = vcombine.low %v1022, %v1029
        %v1052 = vunpack.c.l.s4 1983009808
        %v1053 = vunpack.c.0.s8 %v1052
        %v1054 = vlaneseq
        %v1055 = vshrl.u32 %v1054, 7
        %v1056 = vsub.s32 %v1053, %v1055
        %v1057 = vrot.slane %v1050, %v1056
        %v1058 = vcombine.low %v1046, %v1047
        %v1060 = vunpack.c.l.s4 1983009808
        %v1061 = vunpack.c.0.s8 %v1060
        %v1062 = vlaneseq
        %v1063 = vshrl.u32 %v1062, 7
        %v1064 = vsub.s32 %v1061, %v1063
        %v1065 = vrot.slane %v1058, %v1064
        %v1066 = vcombine.low %v1038, %v1045
        %v1068 = vunpack.c.l.s4 1983009808
        %v1069 = vunpack.c.0.s8 %v1068
        %v1070 = vlaneseq
        %v1071 = vshrl.u32 %v1070, 7
        %v1072 = vsub.s32 %v1069, %v1071
        %v1073 = vrot.slane %v1066, %v1072
        %v1074 = vcombine.low %v1048, %v1049
        %v1076 = vunpack.c.l.s4 1983009808
        %v1077 = vunpack.c.0.s8 %v1076
        %v1078 = vlaneseq
        %v1079 = vshrl.u32 %v1078, 7
        %v1080 = vsub.s32 %v1077, %v1079
        %v1081 = vrot.slane %v1074, %v1080
        %v1082 = vcombine.low %v1057, %v1065
        %v1083 = vcombine.high %v1057, %v1065
        %v1085 = vunpack.c.l.s4 1934713408
        %v1086 = vunpack.c.0.s8 %v1085
        %v1087 = vlaneseq
        %v1088 = vshrl.u32 %v1087, 7
        %v1089 = vsub.s32 %v1086, %v1088
        %v1090 = vrot.slane %v1082, %v1089
        %v1092 = vunpack.c.l.s4 1934713408
        %v1093 = vunpack.c.0.s8 %v1092
        %v1094 = vlaneseq
        %v1095 = vshrl.u32 %v1094, 7
        %v1096 = vsub.s32 %v1093, %v1095
        %v1097 = vrot.slane %v1083, %v1096
        %v1098 = vcombine.low %v1073, %v1081
        %v1099 = vcombine.high %v1073, %v1081
        %v1101 = vunpack.c.l.s4 1934713408
        %v1102 = vunpack.c.0.s8 %v1101
        %v1103 = vlaneseq
        %v1104 = vshrl.u32 %v1103, 7
        %v1105 = vsub.s32 %v1102, %v1104
        %v1106 = vrot.slane %v1098, %v1105
        %v1108 = vunpack.c.l.s4 1934713408
        %v1109 = vunpack.c.0.s8 %v1108
        %v1110 = vlaneseq
        %v1111 = vshrl.u32 %v1110, 7
        %v1112 = vsub.s32 %v1109, %v1111
        %v1113 = vrot.slane %v1099, %v1112
        %v1114 = vcombine.low %v1090, %v1106
        %v1115 = vcombine.high %v1090, %v1106
        %v1116 = vcombine.low %v1097, %v1113
        %v1117 = vcombine.high %v1097, %v1113
        %1118 = vst.msk [vmem:[%s422] sm:$0xff] %vm655, %v1114
        %1119 = vst.msk [vmem:[%s422 + $0x8] sm:$0xff] %vm655, %v1115
        %1120 = vst.msk [vmem:[%s422 + $0x10] sm:$0xff] %vm655, %v1116
        %1121 = vst.msk [vmem:[%s422 + $0x18] sm:$0xff] %vm655, %v1117
        %s1122 = sand.u32 %s202, 1
        %s1123 = sand.u32 %s202, 1
        %s1124 = smul.addr %s1123, 32
        %s1125 = scalar_lea.vmem [#allocation9], %s1124
        %s1126 = sand.u32 %s230, 1
        %s1127 = sand.u32 %s230, 1
        %s1128 = smul.addr %s1127, 32
        %s1129 = scalar_lea.vmem [#allocation10], %s1128
        %s1130 = sand.u32 %s258, 1
        %s1131 = sand.u32 %s258, 1
        %s1132 = smul.addr %s1131, 32
        %s1133 = scalar_lea.vmem [#allocation11], %s1132
        // Predicated region
        $region65: #{tpu_custom_call.1} parent=47 // pred_check
          %p1134 = pneg %p212
        $region66: #{tpu_custom_call.1} parent=47 // pred_check_branch
          %1136 = sbr.rel (%p1134) target = $region68
        $region67: #{tpu_custom_call.1} parent=47 // pred_region
          %s1137 = smul.addr %s30, 8
          %s1138 = sadd.s32 %s31, %s1137
          %s1139 = smul.addr %s1138, 8
          %s1140 = scalar_lea.vmem %s7, %s1139
          // Predicated region
          $region69: #{tpu_custom_call.1} parent=67 // pred_check
            _
          $region70: #{tpu_custom_call.1} parent=67 // pred_check_branch
            %1142 = sbr.rel (0) target = $region72
          $region71: #{tpu_custom_call.1} parent=67 // pred_region
            // Predicated region
            $region73: #{tpu_custom_call.1} parent=71 // pred_check
              _
            $region74: #{tpu_custom_call.1} parent=71 // pred_check_branch
              %1144 = sbr.rel (0) target = $region76
            $region75: #{tpu_custom_call.1} parent=71 // pred_region
              // Predicated region
              $region88: #{tpu_custom_call.1} parent=75 // pred_check
                _
              $region89: #{tpu_custom_call.1} parent=75 // pred_check_branch
                %1166 = sbr.rel (0) target = $region91
              $region90: #{tpu_custom_call.1} parent=75 // pred_region
                loop: start=0, step=1, limit=1
                $region92: #{tpu_custom_call.1} parent=90 // loop_pre_header
                  _
                $region93: #{tpu_custom_call.1} parent=90 // loop_header
                  %s1168 = sphi 0, %s1172
                  %p1169 = scmp.ge.s32.totalorder %s1168, 1
                  %s1173 = sphi %s1125, %s1125
                  %s1174 = sphi %s1140, %s1140
                $region94: #{tpu_custom_call.1} parent=90 // loop_header_branch
                  %1171 = sbr.rel (%p1169) target = $region98
                $region95: #{tpu_custom_call.1} parent=90 // loop_body
                  %v1175 = vld [vmem:[%s1173] sm:$0xff]
                  %1176 = vst [vmem:[%s1174] sm:$0xff] %v1175
                  %v1177 = vld [vmem:[%s1173 + $0x8] sm:$0xff]
                  %1178 = vst [vmem:[%s1174 + $0x10] sm:$0xff] %v1177
                  %v1179 = vld [vmem:[%s1173 + $0x10] sm:$0xff]
                  %1180 = vst [vmem:[%s1174 + $0x20] sm:$0xff] %v1179
                  %v1181 = vld [vmem:[%s1173 + $0x18] sm:$0xff]
                  %1182 = vst [vmem:[%s1174 + $0x30] sm:$0xff] %v1181
                $region96: #{tpu_custom_call.1} parent=90 // loop_footer
                  %s1172 = sadd.s32 1, %s1168
                $region97: #{tpu_custom_call.1} parent=90 // loop_footer_branch
                  %1167 = sbr.rel target = $region93
                $region98: #{tpu_custom_call.1} parent=90 // loop_exit
                  _
              $region91: #{tpu_custom_call.1} parent=75 // pred_fallthru
                _
              // Predicated region
              $region99: #{tpu_custom_call.1} parent=75 // pred_check
                _
              $region100: #{tpu_custom_call.1} parent=75 // pred_check_branch
                %1184 = sbr.rel target = $region102
              $region101: #{tpu_custom_call.1} parent=75 // pred_region
                _
              $region102: #{tpu_custom_call.1} parent=75 // pred_fallthru
                _
            $region76: #{tpu_custom_call.1} parent=71 // pred_fallthru
              _
            // Predicated region
            $region77: #{tpu_custom_call.1} parent=71 // pred_check
              _
            $region78: #{tpu_custom_call.1} parent=71 // pred_check_branch
              %1146 = sbr.rel target = $region80
            $region79: #{tpu_custom_call.1} parent=71 // pred_region
              %s1148 = ssub.s32 256, 1
              loop: start=0, step=1, limit=1
              $region81: #{tpu_custom_call.1} parent=79 // loop_pre_header
                _
              $region82: #{tpu_custom_call.1} parent=79 // loop_header
                %s1150 = sphi 0, %s1154
                %p1151 = scmp.ge.s32.totalorder %s1150, 1
                %s1155 = sphi %s1125, %s1125
                %s1156 = sphi %s1140, %s1140
              $region83: #{tpu_custom_call.1} parent=79 // loop_header_branch
                %1153 = sbr.rel (%p1151) target = $region87
              $region84: #{tpu_custom_call.1} parent=79 // loop_body
                %v1157 = vld [vmem:[%s1155] sm:%s1148]
                %1158 = vst [vmem:[%s1156] sm:%s1148] %v1157
                %v1159 = vld [vmem:[%s1155 + $0x8] sm:%s1148]
                %1160 = vst [vmem:[%s1156 + $0x10] sm:%s1148] %v1159
                %v1161 = vld [vmem:[%s1155 + $0x10] sm:%s1148]
                %1162 = vst [vmem:[%s1156 + $0x20] sm:%s1148] %v1161
                %v1163 = vld [vmem:[%s1155 + $0x18] sm:%s1148]
                %1164 = vst [vmem:[%s1156 + $0x30] sm:%s1148] %v1163
              $region85: #{tpu_custom_call.1} parent=79 // loop_footer
                %s1154 = sadd.s32 1, %s1150
              $region86: #{tpu_custom_call.1} parent=79 // loop_footer_branch
                %1149 = sbr.rel target = $region82
              $region87: #{tpu_custom_call.1} parent=79 // loop_exit
                _
            $region80: #{tpu_custom_call.1} parent=71 // pred_fallthru
              _
          $region72: #{tpu_custom_call.1} parent=67 // pred_fallthru
            _
          %1185 = vnop
        $region68: #{tpu_custom_call.1} parent=47 // pred_fallthru
          _
        // Predicated region
        $region103: #{tpu_custom_call.1} parent=47 // pred_check
          %p1186 = pneg %p240
        $region104: #{tpu_custom_call.1} parent=47 // pred_check_branch
          %1188 = sbr.rel (%p1186) target = $region106
        $region105: #{tpu_custom_call.1} parent=47 // pred_region
          %s1189 = smul.addr %s30, 8
          %s1190 = sadd.s32 %s31, %s1189
          %s1191 = smul.addr %s1190, 8
          %s1192 = scalar_lea.vmem %s8, %s1191
          // Predicated region
          $region107: #{tpu_custom_call.1} parent=105 // pred_check
            _
          $region108: #{tpu_custom_call.1} parent=105 // pred_check_branch
            %1194 = sbr.rel (0) target = $region110
          $region109: #{tpu_custom_call.1} parent=105 // pred_region
            // Predicated region
            $region111: #{tpu_custom_call.1} parent=109 // pred_check
              _
            $region112: #{tpu_custom_call.1} parent=109 // pred_check_branch
              %1196 = sbr.rel (0) target = $region114
            $region113: #{tpu_custom_call.1} parent=109 // pred_region
              // Predicated region
              $region126: #{tpu_custom_call.1} parent=113 // pred_check
                _
              $region127: #{tpu_custom_call.1} parent=113 // pred_check_branch
                %1218 = sbr.rel (0) target = $region129
              $region128: #{tpu_custom_call.1} parent=113 // pred_region
                loop: start=0, step=1, limit=1
                $region130: #{tpu_custom_call.1} parent=128 // loop_pre_header
                  _
                $region131: #{tpu_custom_call.1} parent=128 // loop_header
                  %s1220 = sphi 0, %s1224
                  %p1221 = scmp.ge.s32.totalorder %s1220, 1
                  %s1225 = sphi %s1129, %s1129
                  %s1226 = sphi %s1192, %s1192
                $region132: #{tpu_custom_call.1} parent=128 // loop_header_branch
                  %1223 = sbr.rel (%p1221) target = $region136
                $region133: #{tpu_custom_call.1} parent=128 // loop_body
                  %v1227 = vld [vmem:[%s1225] sm:$0xff]
                  %1228 = vst [vmem:[%s1226] sm:$0xff] %v1227
                  %v1229 = vld [vmem:[%s1225 + $0x8] sm:$0xff]
                  %1230 = vst [vmem:[%s1226 + $0x10] sm:$0xff] %v1229
                  %v1231 = vld [vmem:[%s1225 + $0x10] sm:$0xff]
                  %1232 = vst [vmem:[%s1226 + $0x20] sm:$0xff] %v1231
                  %v1233 = vld [vmem:[%s1225 + $0x18] sm:$0xff]
                  %1234 = vst [vmem:[%s1226 + $0x30] sm:$0xff] %v1233
                $region134: #{tpu_custom_call.1} parent=128 // loop_footer
                  %s1224 = sadd.s32 1, %s1220
                $region135: #{tpu_custom_call.1} parent=128 // loop_footer_branch
                  %1219 = sbr.rel target = $region131
                $region136: #{tpu_custom_call.1} parent=128 // loop_exit
                  _
              $region129: #{tpu_custom_call.1} parent=113 // pred_fallthru
                _
              // Predicated region
              $region137: #{tpu_custom_call.1} parent=113 // pred_check
                _
              $region138: #{tpu_custom_call.1} parent=113 // pred_check_branch
                %1236 = sbr.rel target = $region140
              $region139: #{tpu_custom_call.1} parent=113 // pred_region
                _
              $region140: #{tpu_custom_call.1} parent=113 // pred_fallthru
                _
            $region114: #{tpu_custom_call.1} parent=109 // pred_fallthru
              _
            // Predicated region
            $region115: #{tpu_custom_call.1} parent=109 // pred_check
              _
            $region116: #{tpu_custom_call.1} parent=109 // pred_check_branch
              %1198 = sbr.rel target = $region118
            $region117: #{tpu_custom_call.1} parent=109 // pred_region
              %s1200 = ssub.s32 256, 1
              loop: start=0, step=1, limit=1
              $region119: #{tpu_custom_call.1} parent=117 // loop_pre_header
                _
              $region120: #{tpu_custom_call.1} parent=117 // loop_header
                %s1202 = sphi 0, %s1206
                %p1203 = scmp.ge.s32.totalorder %s1202, 1
                %s1207 = sphi %s1129, %s1129
                %s1208 = sphi %s1192, %s1192
              $region121: #{tpu_custom_call.1} parent=117 // loop_header_branch
                %1205 = sbr.rel (%p1203) target = $region125
              $region122: #{tpu_custom_call.1} parent=117 // loop_body
                %v1209 = vld [vmem:[%s1207] sm:%s1200]
                %1210 = vst [vmem:[%s1208] sm:%s1200] %v1209
                %v1211 = vld [vmem:[%s1207 + $0x8] sm:%s1200]
                %1212 = vst [vmem:[%s1208 + $0x10] sm:%s1200] %v1211
                %v1213 = vld [vmem:[%s1207 + $0x10] sm:%s1200]
                %1214 = vst [vmem:[%s1208 + $0x20] sm:%s1200] %v1213
                %v1215 = vld [vmem:[%s1207 + $0x18] sm:%s1200]
                %1216 = vst [vmem:[%s1208 + $0x30] sm:%s1200] %v1215
              $region123: #{tpu_custom_call.1} parent=117 // loop_footer
                %s1206 = sadd.s32 1, %s1202
              $region124: #{tpu_custom_call.1} parent=117 // loop_footer_branch
                %1201 = sbr.rel target = $region120
              $region125: #{tpu_custom_call.1} parent=117 // loop_exit
                _
            $region118: #{tpu_custom_call.1} parent=109 // pred_fallthru
              _
          $region110: #{tpu_custom_call.1} parent=105 // pred_fallthru
            _
          %1237 = vnop
        $region106: #{tpu_custom_call.1} parent=47 // pred_fallthru
          _
        // Predicated region
        $region141: #{tpu_custom_call.1} parent=47 // pred_check
          %p1238 = pneg %p268
        $region142: #{tpu_custom_call.1} parent=47 // pred_check_branch
          %1240 = sbr.rel (%p1238) target = $region144
        $region143: #{tpu_custom_call.1} parent=47 // pred_region
          %s1241 = smul.addr %s30, 8
          %s1242 = sadd.s32 %s31, %s1241
          %s1243 = smul.addr %s1242, 8
          %s1244 = scalar_lea.vmem %s9, %s1243
          // Predicated region
          $region145: #{tpu_custom_call.1} parent=143 // pred_check
            _
          $region146: #{tpu_custom_call.1} parent=143 // pred_check_branch
            %1246 = sbr.rel (0) target = $region148
          $region147: #{tpu_custom_call.1} parent=143 // pred_region
            // Predicated region
            $region149: #{tpu_custom_call.1} parent=147 // pred_check
              _
            $region150: #{tpu_custom_call.1} parent=147 // pred_check_branch
              %1248 = sbr.rel (0) target = $region152
            $region151: #{tpu_custom_call.1} parent=147 // pred_region
              // Predicated region
              $region164: #{tpu_custom_call.1} parent=151 // pred_check
                _
              $region165: #{tpu_custom_call.1} parent=151 // pred_check_branch
                %1270 = sbr.rel (0) target = $region167
              $region166: #{tpu_custom_call.1} parent=151 // pred_region
                loop: start=0, step=1, limit=1
                $region168: #{tpu_custom_call.1} parent=166 // loop_pre_header
                  _
                $region169: #{tpu_custom_call.1} parent=166 // loop_header
                  %s1272 = sphi 0, %s1276
                  %p1273 = scmp.ge.s32.totalorder %s1272, 1
                  %s1277 = sphi %s1133, %s1133
                  %s1278 = sphi %s1244, %s1244
                $region170: #{tpu_custom_call.1} parent=166 // loop_header_branch
                  %1275 = sbr.rel (%p1273) target = $region174
                $region171: #{tpu_custom_call.1} parent=166 // loop_body
                  %v1279 = vld [vmem:[%s1277] sm:$0xff]
                  %1280 = vst [vmem:[%s1278] sm:$0xff] %v1279
                  %v1281 = vld [vmem:[%s1277 + $0x8] sm:$0xff]
                  %1282 = vst [vmem:[%s1278 + $0x10] sm:$0xff] %v1281
                  %v1283 = vld [vmem:[%s1277 + $0x10] sm:$0xff]
                  %1284 = vst [vmem:[%s1278 + $0x20] sm:$0xff] %v1283
                  %v1285 = vld [vmem:[%s1277 + $0x18] sm:$0xff]
                  %1286 = vst [vmem:[%s1278 + $0x30] sm:$0xff] %v1285
                $region172: #{tpu_custom_call.1} parent=166 // loop_footer
                  %s1276 = sadd.s32 1, %s1272
                $region173: #{tpu_custom_call.1} parent=166 // loop_footer_branch
                  %1271 = sbr.rel target = $region169
                $region174: #{tpu_custom_call.1} parent=166 // loop_exit
                  _
              $region167: #{tpu_custom_call.1} parent=151 // pred_fallthru
                _
              // Predicated region
              $region175: #{tpu_custom_call.1} parent=151 // pred_check
                _
              $region176: #{tpu_custom_call.1} parent=151 // pred_check_branch
                %1288 = sbr.rel target = $region178
              $region177: #{tpu_custom_call.1} parent=151 // pred_region
                _
              $region178: #{tpu_custom_call.1} parent=151 // pred_fallthru
                _
            $region152: #{tpu_custom_call.1} parent=147 // pred_fallthru
              _
            // Predicated region
            $region153: #{tpu_custom_call.1} parent=147 // pred_check
              _
            $region154: #{tpu_custom_call.1} parent=147 // pred_check_branch
              %1250 = sbr.rel target = $region156
            $region155: #{tpu_custom_call.1} parent=147 // pred_region
              %s1252 = ssub.s32 256, 1
              loop: start=0, step=1, limit=1
              $region157: #{tpu_custom_call.1} parent=155 // loop_pre_header
                _
              $region158: #{tpu_custom_call.1} parent=155 // loop_header
                %s1254 = sphi 0, %s1258
                %p1255 = scmp.ge.s32.totalorder %s1254, 1
                %s1259 = sphi %s1133, %s1133
                %s1260 = sphi %s1244, %s1244
              $region159: #{tpu_custom_call.1} parent=155 // loop_header_branch
                %1257 = sbr.rel (%p1255) target = $region163
              $region160: #{tpu_custom_call.1} parent=155 // loop_body
                %v1261 = vld [vmem:[%s1259] sm:%s1252]
                %1262 = vst [vmem:[%s1260] sm:%s1252] %v1261
                %v1263 = vld [vmem:[%s1259 + $0x8] sm:%s1252]
                %1264 = vst [vmem:[%s1260 + $0x10] sm:%s1252] %v1263
                %v1265 = vld [vmem:[%s1259 + $0x10] sm:%s1252]
                %1266 = vst [vmem:[%s1260 + $0x20] sm:%s1252] %v1265
                %v1267 = vld [vmem:[%s1259 + $0x18] sm:%s1252]
                %1268 = vst [vmem:[%s1260 + $0x30] sm:%s1252] %v1267
              $region161: #{tpu_custom_call.1} parent=155 // loop_footer
                %s1258 = sadd.s32 1, %s1254
              $region162: #{tpu_custom_call.1} parent=155 // loop_footer_branch
                %1253 = sbr.rel target = $region158
              $region163: #{tpu_custom_call.1} parent=155 // loop_exit
                _
            $region156: #{tpu_custom_call.1} parent=147 // pred_fallthru
              _
          $region148: #{tpu_custom_call.1} parent=143 // pred_fallthru
            _
          %1289 = vnop
        $region144: #{tpu_custom_call.1} parent=47 // pred_fallthru
          _
      $region48: #{tpu_custom_call.1} parent=5 // pred_fallthru
        _
      %p1290 = scmp.le.s32.totalorder 2, %s21
      // Predicated region
      $region179: #{tpu_custom_call.1} parent=5 // pred_check
        %p1291 = pneg %p1290
      $region180: #{tpu_custom_call.1} parent=5 // pred_check_branch
        %1293 = sbr.rel (%p1291) target = $region182
      $region181: #{tpu_custom_call.1} parent=5 // pred_region
        %s1294 = ssub.s32 %s21, 2
        // Predicated region
        $region183: #{tpu_custom_call.1} parent=181 // pred_check
          %p1295 = pneg %p218
        $region184: #{tpu_custom_call.1} parent=181 // pred_check_branch
          %1297 = sbr.rel (%p1295) target = $region186
        $region185: #{tpu_custom_call.1} parent=181 // pred_region
          %s1298 = sand.u32 %s203, 1
          %s1299 = sand.u32 %s203, 1
          %s1300 = smul.addr %s1299, 32
          %s1301 = scalar_lea.vmem [#allocation9], %s1300
        $region186: #{tpu_custom_call.1} parent=181 // pred_fallthru
          _
        // Predicated region
        $region187: #{tpu_custom_call.1} parent=181 // pred_check
          %p1302 = pneg %p246
        $region188: #{tpu_custom_call.1} parent=181 // pred_check_branch
          %1304 = sbr.rel (%p1302) target = $region190
        $region189: #{tpu_custom_call.1} parent=181 // pred_region
          %s1305 = sand.u32 %s231, 1
          %s1306 = sand.u32 %s231, 1
          %s1307 = smul.addr %s1306, 32
          %s1308 = scalar_lea.vmem [#allocation10], %s1307
        $region190: #{tpu_custom_call.1} parent=181 // pred_fallthru
          _
        // Predicated region
        $region191: #{tpu_custom_call.1} parent=181 // pred_check
          %p1309 = pneg %p274
        $region192: #{tpu_custom_call.1} parent=181 // pred_check_branch
          %1311 = sbr.rel (%p1309) target = $region194
        $region193: #{tpu_custom_call.1} parent=181 // pred_region
          %s1312 = sand.u32 %s259, 1
          %s1313 = sand.u32 %s259, 1
          %s1314 = smul.addr %s1313, 32
          %s1315 = scalar_lea.vmem [#allocation11], %s1314
        $region194: #{tpu_custom_call.1} parent=181 // pred_fallthru
          _
      $region182: #{tpu_custom_call.1} parent=5 // pred_fallthru
        _
    $region6: #{tpu_custom_call.1} parent=1 // loop_footer
      %s25 = sadd.s32 1, %s21
    $region7: #{tpu_custom_call.1} parent=1 // loop_footer_branch
      %20 = sbr.rel target = $region3
    $region8: #{tpu_custom_call.1} parent=1 // loop_exit
      _
    %1316 = vsyncpa [#allocation3], 1
    %s1317 = scalar_lea.sflag [#allocation3], 1
    %1318 = vsyncpa %s1317, 1
    %1319 = vsyncpa [#allocation5], 1
    %1320 = vsyncpa [#allocation8], 1

</llo_original>
